<compile_context>
chip_gen: v7x
topology: tpu7x:2x2x1
jax: 0.10.0
libtpu: 0.0.40
codegen_flags: <defaults>
</compile_context>

<pallas_src>
import functools

import numpy as np

import jax
import jax.numpy as jnp
from jax import lax
from jax.experimental import pallas as pl
from jax.experimental.pallas import tpu as pltpu

LEAK = 0.2


def _leaky(x):
    return jnp.where(x > 0, x, LEAK * x)


# ----------------------------- fused Pallas kernel -----------------------------

def _discriminator_kernel(x_ref, w1_ref, b1_ref, pair_ref, mask3_ref,
                          w3m_ref, stdw_ref, b3_ref,
                          w4m_ref, b4_ref, wl_ref, bl_ref,
                          o_ref, cols_ref, flat_ref, *, n, hw, ndf, shifts):
    f32 = jnp.float32
    bf16 = jnp.bfloat16

    # --- from_rgb: 1x1 conv (per-pixel channel matmul, K padded 3->8) + bias +
    #     LeakyReLU.  generalized_drop_out(strength=0.0) is the identity.
    h1 = jnp.dot(x_ref[...], w1_ref[...], preferred_element_type=f32)
    h1 = _leaky(h1 + b1_ref[...])                                 # (NHW, ndf) f32

    # --- minibatch-std scalar: biased variance over the batch per (pixel,chan),
    #     single pass (sum & sum of squares) via a tiny pair-sum matmul
    #     (pair[p, p*n+b] = 1), then mean of the per-(pixel,chan) std.
    s1 = jnp.dot(pair_ref[...], h1, preferred_element_type=f32)          # (HW, ndf)
    s2 = jnp.dot(pair_ref[...], h1 * h1, preferred_element_type=f32)
    mean = s1 * (1.0 / n)
    var = jnp.maximum(s2 * (1.0 / n) - mean * mean, 0.0)
    std = jnp.mean(jnp.sqrt(var + 1e-8))                          # scalar

    # --- 3x3 conv, pad=1 (im2col-lite): per tap t the zero-padded spatial shift
    #     is a circular row roll (XLU) + validity mask (VPU); taps land in lane
    #     slots [t*ndf, (t+1)*ndf) of the cols scratch, then ONE K=9*ndf matmul.
    #     pltpu.roll follows jnp.roll semantics: out[r] = x[(r - shift) % NHW],
    #     so shift = (-row_delta) % NHW (precomputed host-side, static).
    #     The constant std channel is folded as std * per-row weight sum.
    for t in range(9):
        sh = shifts[t]
        rolled = h1 if sh == 0 else pltpu.roll(h1, sh, axis=0)
        cols_ref[:, t * ndf:(t + 1) * ndf] = rolled * mask3_ref[:, t:t + 1]
    pre2 = jnp.dot(cols_ref[...].astype(bf16), w3m_ref[...],
                   preferred_element_type=f32)                    # (NHW, ndf)
    h2 = _leaky(pre2 + std * stdw_ref[...] + b3_ref[...])

    # --- 4x4 valid conv (4x4 -> 1x1) as ONE matmul: rows are position-major, so
    #     the two batch rows of position p are contiguous; lay them into lane
    #     slots of the (N, HW*ndf) flat scratch, then (N, HW*ndf) @ (HW*ndf, ndf).
    for p in range(hw):
        flat_ref[:, p * ndf:(p + 1) * ndf] = h2[p * n:(p + 1) * n, :]
    feat = jnp.dot(flat_ref[...].astype(bf16), w4m_ref[...],
                   preferred_element_type=f32)                    # (N, ndf)
    h3 = _leaky(feat + b4_ref[...])

    # --- Flatten -> Linear(ndf, 1) -> Sigmoid (EUP exp + approx reciprocal).
    z = jnp.dot(h3.astype(bf16), wl_ref[...], preferred_element_type=f32)
    z = z + bl_ref[...]
    o_ref[...] = pl.reciprocal(1.0 + jnp.exp(-z), approx=True)


# ----------------------------- host-side constants -----------------------------

def build_constants(n, h, w):
    """Tiny shape-only constants for the position-major row layout
    (row = (y*w + x)*n + b):
      pair  (HW, NHW): 0/1 batch-reduction matrix for the minibatch-std stats.
      mask3 (NHW, 9) : validity of each 3x3 tap per output row (zero padding)."""
    hw = h * w
    nhw = n * hw

    pair = np.zeros((hw, nhw), np.float32)
    for p in range(hw):
        for b in range(n):
            pair[p, p * n + b] = 1.0

    mask3 = np.zeros((nhw, 9), np.float32)
    for t in range(9):
        oh, ow = t // 3 - 1, t % 3 - 1
        for p in range(hw):
            y, x = p // w, p % w
            if 0 <= y + oh < h and 0 <= x + ow < w:
                for b in range(n):
                    mask3[p * n + b, t] = 1.0

    return jnp.asarray(pair), jnp.asarray(mask3)


# ----------------------------- forward pass -----------------------------

def _full_spec(shape):
    # Whole-array block (grid has a single step), so the (8,128) divisibility
    # rule is satisfied by "block == full array dims".
    return pl.BlockSpec(shape, lambda i, _nd=len(shape): (0,) * _nd)


def discriminator_forward(x_nchw, params, constants):
    n, nc, h, w = x_nchw.shape
    hw = h * w
    nhw = n * hw
    ndf = params["b1"].shape[0]
    pair, mask3 = constants
    bf16 = jnp.bfloat16

    # NCHW -> (H, W, N, C) -> (H*W*N, C) position-major rows; pad K: nc -> 8.
    kpad = 8
    x = jnp.transpose(x_nchw, (2, 3, 0, 1)).reshape(nhw, nc)
    x = jnp.pad(x, ((0, 0), (0, kpad - nc))).astype(bf16)

    # Weight preprocessing (tiny, wrapper-side): flatten convs to matmul
    # operands (bf16), fold the std channel of the 3x3 conv into a per-row
    # f32 vector.
    w1 = jnp.pad(params["w1"][0, 0], ((0, kpad - nc), (0, 0))).astype(bf16)   # (8, ndf)
    b1 = params["b1"].reshape(1, ndf)
    w3 = params["w3"]                                             # (3,3,ndf+1,ndf) HWIO
    w3m = w3[:, :, :ndf, :].reshape(9 * ndf, ndf).astype(bf16)    # tap-major main weights
    stdw = mask3 @ w3[:, :, ndf, :].reshape(9, ndf)               # (NHW, ndf) std fold, f32
    b3 = params["b3"].reshape(1, ndf)
    w4m = params["w4"].reshape(hw * ndf, ndf).astype(bf16)        # position-major
    b4 = params["b4"].reshape(1, ndf)
    wl = params["wl"].astype(bf16)                                # (ndf, 1)
    bl = params["bl"].reshape(1, 1)

    # Static circular-roll amounts per 3x3 tap (position-major row delta).
    shifts = tuple(
        (-(n * ((t // 3 - 1) * w + (t % 3 - 1)))) % nhw for t in range(9)
    )

    inputs = [x, w1, b1, pair, mask3, w3m, stdw, b3, w4m, b4, wl, bl]
    kernel = functools.partial(_discriminator_kernel, n=n, hw=hw, ndf=ndf,
                               shifts=shifts)
    return pl.pallas_call(
        kernel,
        grid=(1,),
        in_specs=[_full_spec(a.shape) for a in inputs],
        out_specs=_full_spec((n, 1)),
        out_shape=jax.ShapeDtypeStruct((n, 1), jnp.float32),
        scratch_shapes=[
            pltpu.VMEM((nhw, 9 * ndf), jnp.float32),   # 3x3 im2col cols
            pltpu.VMEM((n, hw * ndf), jnp.float32),    # 4x4 flattened operand
        ],
        compiler_params=pltpu.CompilerParams(dimension_semantics=("arbitrary",)),
    )(*inputs)


# ----------------------------- reference (pure JAX) -----------------------------

def reference_forward(x_nchw, params, *, ndf):
    n, nc, h, w = x_nchw.shape
    x = jnp.transpose(x_nchw, (0, 2, 3, 1))
    dn = ("NHWC", "HWIO", "NHWC")
    hi = lax.conv_general_dilated(x, params["w1"], (1, 1), "VALID",
                                  dimension_numbers=dn,
                                  precision=lax.Precision.HIGHEST) + params["b1"]
    h1 = _leaky(hi)
    mean = jnp.mean(h1, axis=0, keepdims=True)
    std = jnp.sqrt(jnp.mean((h1 - mean) ** 2, axis=0) + 1e-8)
    s = jnp.mean(std)
    h1c = jnp.concatenate([h1, jnp.full((n, h, w, 1), s, jnp.float32)], axis=-1)
    h2 = _leaky(lax.conv_general_dilated(h1c, params["w3"], (1, 1), ((1, 1), (1, 1)),
                                         dimension_numbers=dn,
                                         precision=lax.Precision.HIGHEST) + params["b3"])
    h3 = _leaky(lax.conv_general_dilated(h2, params["w4"], (1, 1), "VALID",
                                         dimension_numbers=dn,
                                         precision=lax.Precision.HIGHEST) + params["b4"])
    h3 = h3.reshape(n, ndf)
    return jax.nn.sigmoid(h3 @ params["wl"] + params["bl"].reshape(1, 1))


# ----------------------------- params / main -----------------------------

def init_params(key, *, nc, ndf):
    ks = jax.random.split(key, 8)
    s = 0.1
    return {
        "w1": jax.random.normal(ks[0], (1, 1, nc, ndf), jnp.float32) * s,       # from_rgb 1x1
        "b1": jax.random.normal(ks[1], (ndf,), jnp.float32) * s,
        "w3": jax.random.normal(ks[2], (3, 3, ndf + 1, ndf), jnp.float32) * s,  # 3x3 conv
        "b3": jax.random.normal(ks[3], (ndf,), jnp.float32) * s,
        "w4": jax.random.normal(ks[4], (4, 4, ndf, ndf), jnp.float32) * s,      # 4x4 conv
        "b4": jax.random.normal(ks[5], (ndf,), jnp.float32) * s,
        "wl": jax.random.normal(ks[6], (ndf, 1), jnp.float32) * s,              # Linear(ndf,1)
        "bl": jax.random.normal(ks[7], (1,), jnp.float32) * s,
    }


if __name__ == "__main__":
    N, NC, NDF, RES = 2, 3, 32, 4          # initial discriminator operates at 4x4
    key = jax.random.PRNGKey(0)
    kx, kp = jax.random.split(key)
    x = jax.random.normal(kx, (N, NC, RES, RES), jnp.float32)   # PyTorch NCHW input
    params = init_params(kp, nc=NC, ndf=NDF)
    constants = build_constants(N, RES, RES)

    fwd = jax.jit(discriminator_forward)
    out = jax.block_until_ready(fwd(x, params, constants))

    ref = reference_forward(x, params, ndf=NDF)
    assert out.shape == (N, 1), out.shape
    if not jnp.allclose(out, ref, atol=2e-2, rtol=2e-2):
        raise AssertionError(f"mismatch: pallas={out}, ref={ref}")
    print("KERNEL_OK")
</pallas_src>

<mosaic_0001>
module attributes {stable_mosaic.version = 11 : i64} {
  func.func @_discriminator_kernel(%arg0: i32, %arg1: memref<32x8xbf16, #tpu.memory_space<vmem>>, %arg2: memref<8x32xbf16, #tpu.memory_space<vmem>>, %arg3: memref<1x32xf32, #tpu.memory_space<vmem>>, %arg4: memref<16x32xf32, #tpu.memory_space<vmem>>, %arg5: memref<32x9xf32, #tpu.memory_space<vmem>>, %arg6: memref<288x32xbf16, #tpu.memory_space<vmem>>, %arg7: memref<32x32xf32, #tpu.memory_space<vmem>>, %arg8: memref<1x32xf32, #tpu.memory_space<vmem>>, %arg9: memref<512x32xbf16, #tpu.memory_space<vmem>>, %arg10: memref<1x32xf32, #tpu.memory_space<vmem>>, %arg11: memref<32x1xbf16, #tpu.memory_space<vmem>>, %arg12: memref<1x1xf32, #tpu.memory_space<vmem>>, %arg13: memref<2x1xf32, #tpu.memory_space<vmem>>, %arg14: memref<32x288xf32, #tpu.memory_space<vmem>>, %arg15: memref<2x512xf32, #tpu.memory_space<vmem>>) attributes {dimension_semantics = [#tpu.dimension_semantics<arbitrary>], iteration_bounds = array<i64: 1>, scalar_prefetch = 0 : i64, scratch_operands = 2 : i64, tpu.core_type = #tpu.core_type<tc>, window_params = [{pipeline_mode = #tpu.pipeline_mode<synchronous>, transform_indices = @transform_0, window_bounds = array<i64: 32, 8>}, {pipeline_mode = #tpu.pipeline_mode<synchronous>, transform_indices = @transform_1, window_bounds = array<i64: 8, 32>}, {pipeline_mode = #tpu.pipeline_mode<synchronous>, transform_indices = @transform_2, window_bounds = array<i64: 1, 32>}, {pipeline_mode = #tpu.pipeline_mode<synchronous>, transform_indices = @transform_3, window_bounds = array<i64: 16, 32>}, {pipeline_mode = #tpu.pipeline_mode<synchronous>, transform_indices = @transform_4, window_bounds = array<i64: 32, 9>}, {pipeline_mode = #tpu.pipeline_mode<synchronous>, transform_indices = @transform_5, window_bounds = array<i64: 288, 32>}, {pipeline_mode = #tpu.pipeline_mode<synchronous>, transform_indices = @transform_6, window_bounds = array<i64: 32, 32>}, {pipeline_mode = #tpu.pipeline_mode<synchronous>, transform_indices = @transform_7, window_bounds = array<i64: 1, 32>}, {pipeline_mode = #tpu.pipeline_mode<synchronous>, transform_indices = @transform_8, window_bounds = array<i64: 512, 32>}, {pipeline_mode = #tpu.pipeline_mode<synchronous>, transform_indices = @transform_9, window_bounds = array<i64: 1, 32>}, {pipeline_mode = #tpu.pipeline_mode<synchronous>, transform_indices = @transform_10, window_bounds = array<i64: 32, 1>}, {pipeline_mode = #tpu.pipeline_mode<synchronous>, transform_indices = @transform_11, window_bounds = array<i64: 1, 1>}, {pipeline_mode = #tpu.pipeline_mode<synchronous>, transform_indices = @transform_12, window_bounds = array<i64: 2, 1>}]} {
    %c0 = arith.constant 0 : index
    %c0_0 = arith.constant 0 : index
    %0 = vector.load %arg1[%c0, %c0_0] : memref<32x8xbf16, #tpu.memory_space<vmem>>, vector<32x8xbf16>
    %c0_1 = arith.constant 0 : index
    %c0_2 = arith.constant 0 : index
    %1 = vector.load %arg2[%c0_1, %c0_2] : memref<8x32xbf16, #tpu.memory_space<vmem>>, vector<8x32xbf16>
    %cst = arith.constant dense<0.000000e+00> : vector<32x32xf32>
    %2 = tpu.matmul %0, %1, %cst {dimension_numbers = #tpu.dot_dimension_numbers<[1], [0], [0], [1], [0, 0, 1, 1], [], []>} : vector<32x8xbf16>, vector<8x32xbf16>, vector<32x32xf32> -> vector<32x32xf32>
    %c0_3 = arith.constant 0 : index
    %c0_4 = arith.constant 0 : index
    %3 = vector.load %arg3[%c0_3, %c0_4] : memref<1x32xf32, #tpu.memory_space<vmem>>, vector<1x32xf32>
    %4 = vector.broadcast %3 : vector<1x32xf32> to vector<32x32xf32>
    %5 = arith.addf %2, %4 : vector<32x32xf32>
    %cst_5 = arith.constant 0.000000e+00 : f32
    %6 = vector.broadcast %cst_5 : f32 to vector<32x32xf32>
    %7 = arith.cmpf ogt, %5, %6 : vector<32x32xf32>
    %cst_6 = arith.constant 2.000000e-01 : f32
    %8 = vector.broadcast %cst_6 : f32 to vector<32x32xf32>
    %9 = arith.mulf %8, %5 : vector<32x32xf32>
    %10 = arith.select %7, %5, %9 : vector<32x32xi1>, vector<32x32xf32>
    %c0_7 = arith.constant 0 : index
    %c0_8 = arith.constant 0 : index
    %11 = vector.load %arg4[%c0_7, %c0_8] : memref<16x32xf32, #tpu.memory_space<vmem>>, vector<16x32xf32>
    %cst_9 = arith.constant dense<0.000000e+00> : vector<16x32xf32>
    %12 = tpu.matmul %11, %10, %cst_9 {dimension_numbers = #tpu.dot_dimension_numbers<[1], [0], [0], [1], [0, 0, 1, 1], [], []>} : vector<16x32xf32>, vector<32x32xf32>, vector<16x32xf32> -> vector<16x32xf32>
    %c0_10 = arith.constant 0 : index
    %c0_11 = arith.constant 0 : index
    %13 = vector.load %arg4[%c0_10, %c0_11] : memref<16x32xf32, #tpu.memory_space<vmem>>, vector<16x32xf32>
    %14 = arith.mulf %10, %10 : vector<32x32xf32>
    %cst_12 = arith.constant dense<0.000000e+00> : vector<16x32xf32>
    %15 = tpu.matmul %13, %14, %cst_12 {dimension_numbers = #tpu.dot_dimension_numbers<[1], [0], [0], [1], [0, 0, 1, 1], [], []>} : vector<16x32xf32>, vector<32x32xf32>, vector<16x32xf32> -> vector<16x32xf32>
    %cst_13 = arith.constant 5.000000e-01 : f32
    %16 = vector.broadcast %cst_13 : f32 to vector<16x32xf32>
    %17 = arith.mulf %12, %16 : vector<16x32xf32>
    %cst_14 = arith.constant 5.000000e-01 : f32
    %18 = vector.broadcast %cst_14 : f32 to vector<16x32xf32>
    %19 = arith.mulf %15, %18 : vector<16x32xf32>
    %20 = arith.mulf %17, %17 : vector<16x32xf32>
    %21 = arith.subf %19, %20 : vector<16x32xf32>
    %cst_15 = arith.constant 0.000000e+00 : f32
    %22 = vector.broadcast %cst_15 : f32 to vector<16x32xf32>
    %23 = arith.maximumf %21, %22 : vector<16x32xf32>
    %cst_16 = arith.constant 9.99999993E-9 : f32
    %24 = vector.broadcast %cst_16 : f32 to vector<16x32xf32>
    %25 = arith.addf %23, %24 : vector<16x32xf32>
    %26 = math.sqrt %25 : vector<16x32xf32>
    %27 = vector.shape_cast %26 : vector<16x32xf32> to vector<1x16x32xf32>
    %cst_17 = arith.constant dense<0.000000e+00> : vector<1xf32>
    %28 = vector.multi_reduction <add>, %27, %cst_17 [1, 2] : vector<1x16x32xf32> to vector<1xf32>
    %29 = vector.shape_cast %28 : vector<1xf32> to vector<1x1x1xf32>
    %30 = vector.extract %29[0, 0, 0] : f32 from vector<1x1x1xf32>
    %cst_18 = arith.constant 5.120000e+02 : f32
    %31 = arith.divf %30, %cst_18 : f32
    %c10_i32 = arith.constant 10 : i32
    %32 = tpu.dynamic_rotate %10 by %c10_i32 dim 0 : vector<32x32xf32>, i32 -> vector<32x32xf32>
    %c0_19 = arith.constant 0 : index
    %c0_20 = arith.constant 0 : index
    %33 = vector.load %arg5[%c0_19, %c0_20] : memref<32x9xf32, #tpu.memory_space<vmem>>, vector<32x1xf32>
    %34 = vector.broadcast %33 : vector<32x1xf32> to vector<32x32xf32>
    %35 = arith.mulf %32, %34 : vector<32x32xf32>
    %c0_21 = arith.constant 0 : index
    %c0_22 = arith.constant 0 : index
    %36 = vector.load %arg14[%c0_21, %c0_22] : memref<32x288xf32, #tpu.memory_space<vmem>>, vector<32x32xf32>
    tpu.vector_store %arg14[%c0_21, %c0_22], %35 {strides = array<i32>} : memref<32x288xf32, #tpu.memory_space<vmem>>, vector<32x32xf32>,
    %c8_i32 = arith.constant 8 : i32
    %37 = tpu.dynamic_rotate %10 by %c8_i32 dim 0 : vector<32x32xf32>, i32 -> vector<32x32xf32>
    %c0_23 = arith.constant 0 : index
    %c1 = arith.constant 1 : index
    %38 = vector.load %arg5[%c0_23, %c1] : memref<32x9xf32, #tpu.memory_space<vmem>>, vector<32x1xf32>
    %39 = vector.broadcast %38 : vector<32x1xf32> to vector<32x32xf32>
    %40 = arith.mulf %37, %39 : vector<32x32xf32>
    %c0_24 = arith.constant 0 : index
    %c32 = arith.constant 32 : index
    %41 = vector.load %arg14[%c0_24, %c32] : memref<32x288xf32, #tpu.memory_space<vmem>>, vector<32x32xf32>
    tpu.vector_store %arg14[%c0_24, %c32], %40 {strides = array<i32>} : memref<32x288xf32, #tpu.memory_space<vmem>>, vector<32x32xf32>,
    %c6_i32 = arith.constant 6 : i32
    %42 = tpu.dynamic_rotate %10 by %c6_i32 dim 0 : vector<32x32xf32>, i32 -> vector<32x32xf32>
    %c0_25 = arith.constant 0 : index
    %c2 = arith.constant 2 : index
    %43 = vector.load %arg5[%c0_25, %c2] : memref<32x9xf32, #tpu.memory_space<vmem>>, vector<32x1xf32>
    %44 = vector.broadcast %43 : vector<32x1xf32> to vector<32x32xf32>
    %45 = arith.mulf %42, %44 : vector<32x32xf32>
    %c0_26 = arith.constant 0 : index
    %c64 = arith.constant 64 : index
    %46 = vector.load %arg14[%c0_26, %c64] : memref<32x288xf32, #tpu.memory_space<vmem>>, vector<32x32xf32>
    tpu.vector_store %arg14[%c0_26, %c64], %45 {strides = array<i32>} : memref<32x288xf32, #tpu.memory_space<vmem>>, vector<32x32xf32>,
    %c2_i32 = arith.constant 2 : i32
    %47 = tpu.dynamic_rotate %10 by %c2_i32 dim 0 : vector<32x32xf32>, i32 -> vector<32x32xf32>
    %c0_27 = arith.constant 0 : index
    %c3 = arith.constant 3 : index
    %48 = vector.load %arg5[%c0_27, %c3] : memref<32x9xf32, #tpu.memory_space<vmem>>, vector<32x1xf32>
    %49 = vector.broadcast %48 : vector<32x1xf32> to vector<32x32xf32>
    %50 = arith.mulf %47, %49 : vector<32x32xf32>
    %c0_28 = arith.constant 0 : index
    %c96 = arith.constant 96 : index
    %51 = vector.load %arg14[%c0_28, %c96] : memref<32x288xf32, #tpu.memory_space<vmem>>, vector<32x32xf32>
    tpu.vector_store %arg14[%c0_28, %c96], %50 {strides = array<i32>} : memref<32x288xf32, #tpu.memory_space<vmem>>, vector<32x32xf32>,
    %c0_29 = arith.constant 0 : index
    %c4 = arith.constant 4 : index
    %52 = vector.load %arg5[%c0_29, %c4] : memref<32x9xf32, #tpu.memory_space<vmem>>, vector<32x1xf32>
    %53 = vector.broadcast %52 : vector<32x1xf32> to vector<32x32xf32>
    %54 = arith.mulf %10, %53 : vector<32x32xf32>
    %c0_30 = arith.constant 0 : index
    %c128 = arith.constant 128 : index
    %55 = vector.load %arg14[%c0_30, %c128] : memref<32x288xf32, #tpu.memory_space<vmem>>, vector<32x32xf32>
    tpu.vector_store %arg14[%c0_30, %c128], %54 {strides = array<i32>} : memref<32x288xf32, #tpu.memory_space<vmem>>, vector<32x32xf32>,
    %c30_i32 = arith.constant 30 : i32
    %56 = tpu.dynamic_rotate %10 by %c30_i32 dim 0 : vector<32x32xf32>, i32 -> vector<32x32xf32>
    %c0_31 = arith.constant 0 : index
    %c5 = arith.constant 5 : index
    %57 = vector.load %arg5[%c0_31, %c5] : memref<32x9xf32, #tpu.memory_space<vmem>>, vector<32x1xf32>
    %58 = vector.broadcast %57 : vector<32x1xf32> to vector<32x32xf32>
    %59 = arith.mulf %56, %58 : vector<32x32xf32>
    %c0_32 = arith.constant 0 : index
    %c160 = arith.constant 160 : index
    %60 = vector.load %arg14[%c0_32, %c160] : memref<32x288xf32, #tpu.memory_space<vmem>>, vector<32x32xf32>
    tpu.vector_store %arg14[%c0_32, %c160], %59 {strides = array<i32>} : memref<32x288xf32, #tpu.memory_space<vmem>>, vector<32x32xf32>,
    %c26_i32 = arith.constant 26 : i32
    %61 = tpu.dynamic_rotate %10 by %c26_i32 dim 0 : vector<32x32xf32>, i32 -> vector<32x32xf32>
    %c0_33 = arith.constant 0 : index
    %c6 = arith.constant 6 : index
    %62 = vector.load %arg5[%c0_33, %c6] : memref<32x9xf32, #tpu.memory_space<vmem>>, vector<32x1xf32>
    %63 = vector.broadcast %62 : vector<32x1xf32> to vector<32x32xf32>
    %64 = arith.mulf %61, %63 : vector<32x32xf32>
    %c0_34 = arith.constant 0 : index
    %c192 = arith.constant 192 : index
    %65 = vector.load %arg14[%c0_34, %c192] : memref<32x288xf32, #tpu.memory_space<vmem>>, vector<32x32xf32>
    tpu.vector_store %arg14[%c0_34, %c192], %64 {strides = array<i32>} : memref<32x288xf32, #tpu.memory_space<vmem>>, vector<32x32xf32>,
    %c24_i32 = arith.constant 24 : i32
    %66 = tpu.dynamic_rotate %10 by %c24_i32 dim 0 : vector<32x32xf32>, i32 -> vector<32x32xf32>
    %c0_35 = arith.constant 0 : index
    %c7 = arith.constant 7 : index
    %67 = vector.load %arg5[%c0_35, %c7] : memref<32x9xf32, #tpu.memory_space<vmem>>, vector<32x1xf32>
    %68 = vector.broadcast %67 : vector<32x1xf32> to vector<32x32xf32>
    %69 = arith.mulf %66, %68 : vector<32x32xf32>
    %c0_36 = arith.constant 0 : index
    %c224 = arith.constant 224 : index
    %70 = vector.load %arg14[%c0_36, %c224] : memref<32x288xf32, #tpu.memory_space<vmem>>, vector<32x32xf32>
    tpu.vector_store %arg14[%c0_36, %c224], %69 {strides = array<i32>} : memref<32x288xf32, #tpu.memory_space<vmem>>, vector<32x32xf32>,
    %c22_i32 = arith.constant 22 : i32
    %71 = tpu.dynamic_rotate %10 by %c22_i32 dim 0 : vector<32x32xf32>, i32 -> vector<32x32xf32>
    %c0_37 = arith.constant 0 : index
    %c8 = arith.constant 8 : index
    %72 = vector.load %arg5[%c0_37, %c8] : memref<32x9xf32, #tpu.memory_space<vmem>>, vector<32x1xf32>
    %73 = vector.broadcast %72 : vector<32x1xf32> to vector<32x32xf32>
    %74 = arith.mulf %71, %73 : vector<32x32xf32>
    %c0_38 = arith.constant 0 : index
    %c256 = arith.constant 256 : index
    %75 = vector.load %arg14[%c0_38, %c256] : memref<32x288xf32, #tpu.memory_space<vmem>>, vector<32x32xf32>
    tpu.vector_store %arg14[%c0_38, %c256], %74 {strides = array<i32>} : memref<32x288xf32, #tpu.memory_space<vmem>>, vector<32x32xf32>,
    %c0_39 = arith.constant 0 : index
    %c0_40 = arith.constant 0 : index
    %76 = vector.load %arg14[%c0_39, %c0_40] : memref<32x288xf32, #tpu.memory_space<vmem>>, vector<32x288xf32>
    %77 = arith.truncf %76 : vector<32x288xf32> to vector<32x288xbf16>
    %c0_41 = arith.constant 0 : index
    %c0_42 = arith.constant 0 : index
    %78 = vector.load %arg6[%c0_41, %c0_42] : memref<288x32xbf16, #tpu.memory_space<vmem>>, vector<288x32xbf16>
    %cst_43 = arith.constant dense<0.000000e+00> : vector<32x32xf32>
    %79 = tpu.matmul %77, %78, %cst_43 {dimension_numbers = #tpu.dot_dimension_numbers<[1], [0], [0], [1], [0, 0, 1, 1], [], []>} : vector<32x288xbf16>, vector<288x32xbf16>, vector<32x32xf32> -> vector<32x32xf32>
    %c0_44 = arith.constant 0 : index
    %c0_45 = arith.constant 0 : index
    %80 = vector.load %arg7[%c0_44, %c0_45] : memref<32x32xf32, #tpu.memory_space<vmem>>, vector<32x32xf32>
    %81 = vector.broadcast %31 : f32 to vector<32x32xf32>
    %82 = arith.mulf %81, %80 : vector<32x32xf32>
    %83 = arith.addf %79, %82 : vector<32x32xf32>
    %c0_46 = arith.constant 0 : index
    %c0_47 = arith.constant 0 : index
    %84 = vector.load %arg8[%c0_46, %c0_47] : memref<1x32xf32, #tpu.memory_space<vmem>>, vector<1x32xf32>
    %85 = vector.broadcast %84 : vector<1x32xf32> to vector<32x32xf32>
    %86 = arith.addf %83, %85 : vector<32x32xf32>
    %cst_48 = arith.constant 0.000000e+00 : f32
    %87 = vector.broadcast %cst_48 : f32 to vector<32x32xf32>
    %88 = arith.cmpf ogt, %86, %87 : vector<32x32xf32>
    %cst_49 = arith.constant 2.000000e-01 : f32
    %89 = vector.broadcast %cst_49 : f32 to vector<32x32xf32>
    %90 = arith.mulf %89, %86 : vector<32x32xf32>
    %91 = arith.select %88, %86, %90 : vector<32x32xi1>, vector<32x32xf32>
    %92 = vector.extract_strided_slice %91 {offsets = [0, 0], sizes = [2, 32], strides = [1, 1]} : vector<32x32xf32> to vector<2x32xf32>
    %c0_50 = arith.constant 0 : index
    %c0_51 = arith.constant 0 : index
    %93 = vector.load %arg15[%c0_50, %c0_51] : memref<2x512xf32, #tpu.memory_space<vmem>>, vector<2x32xf32>
    tpu.vector_store %arg15[%c0_50, %c0_51], %92 {strides = array<i32>} : memref<2x512xf32, #tpu.memory_space<vmem>>, vector<2x32xf32>,
    %94 = vector.extract_strided_slice %91 {offsets = [2, 0], sizes = [2, 32], strides = [1, 1]} : vector<32x32xf32> to vector<2x32xf32>
    %c0_52 = arith.constant 0 : index
    %c32_53 = arith.constant 32 : index
    %95 = vector.load %arg15[%c0_52, %c32_53] : memref<2x512xf32, #tpu.memory_space<vmem>>, vector<2x32xf32>
    tpu.vector_store %arg15[%c0_52, %c32_53], %94 {strides = array<i32>} : memref<2x512xf32, #tpu.memory_space<vmem>>, vector<2x32xf32>,
    %96 = vector.extract_strided_slice %91 {offsets = [4, 0], sizes = [2, 32], strides = [1, 1]} : vector<32x32xf32> to vector<2x32xf32>
    %c0_54 = arith.constant 0 : index
    %c64_55 = arith.constant 64 : index
    %97 = vector.load %arg15[%c0_54, %c64_55] : memref<2x512xf32, #tpu.memory_space<vmem>>, vector<2x32xf32>
    tpu.vector_store %arg15[%c0_54, %c64_55], %96 {strides = array<i32>} : memref<2x512xf32, #tpu.memory_space<vmem>>, vector<2x32xf32>,
    %98 = vector.extract_strided_slice %91 {offsets = [6, 0], sizes = [2, 32], strides = [1, 1]} : vector<32x32xf32> to vector<2x32xf32>
    %c0_56 = arith.constant 0 : index
    %c96_57 = arith.constant 96 : index
    %99 = vector.load %arg15[%c0_56, %c96_57] : memref<2x512xf32, #tpu.memory_space<vmem>>, vector<2x32xf32>
    tpu.vector_store %arg15[%c0_56, %c96_57], %98 {strides = array<i32>} : memref<2x512xf32, #tpu.memory_space<vmem>>, vector<2x32xf32>,
    %100 = vector.extract_strided_slice %91 {offsets = [8, 0], sizes = [2, 32], strides = [1, 1]} : vector<32x32xf32> to vector<2x32xf32>
    %c0_58 = arith.constant 0 : index
    %c128_59 = arith.constant 128 : index
    %101 = vector.load %arg15[%c0_58, %c128_59] : memref<2x512xf32, #tpu.memory_space<vmem>>, vector<2x32xf32>
    tpu.vector_store %arg15[%c0_58, %c128_59], %100 {strides = array<i32>} : memref<2x512xf32, #tpu.memory_space<vmem>>, vector<2x32xf32>,
    %102 = vector.extract_strided_slice %91 {offsets = [10, 0], sizes = [2, 32], strides = [1, 1]} : vector<32x32xf32> to vector<2x32xf32>
    %c0_60 = arith.constant 0 : index
    %c160_61 = arith.constant 160 : index
    %103 = vector.load %arg15[%c0_60, %c160_61] : memref<2x512xf32, #tpu.memory_space<vmem>>, vector<2x32xf32>
    tpu.vector_store %arg15[%c0_60, %c160_61], %102 {strides = array<i32>} : memref<2x512xf32, #tpu.memory_space<vmem>>, vector<2x32xf32>,
    %104 = vector.extract_strided_slice %91 {offsets = [12, 0], sizes = [2, 32], strides = [1, 1]} : vector<32x32xf32> to vector<2x32xf32>
    %c0_62 = arith.constant 0 : index
    %c192_63 = arith.constant 192 : index
    %105 = vector.load %arg15[%c0_62, %c192_63] : memref<2x512xf32, #tpu.memory_space<vmem>>, vector<2x32xf32>
    tpu.vector_store %arg15[%c0_62, %c192_63], %104 {strides = array<i32>} : memref<2x512xf32, #tpu.memory_space<vmem>>, vector<2x32xf32>,
    %106 = vector.extract_strided_slice %91 {offsets = [14, 0], sizes = [2, 32], strides = [1, 1]} : vector<32x32xf32> to vector<2x32xf32>
    %c0_64 = arith.constant 0 : index
    %c224_65 = arith.constant 224 : index
    %107 = vector.load %arg15[%c0_64, %c224_65] : memref<2x512xf32, #tpu.memory_space<vmem>>, vector<2x32xf32>
    tpu.vector_store %arg15[%c0_64, %c224_65], %106 {strides = array<i32>} : memref<2x512xf32, #tpu.memory_space<vmem>>, vector<2x32xf32>,
    %108 = vector.extract_strided_slice %91 {offsets = [16, 0], sizes = [2, 32], strides = [1, 1]} : vector<32x32xf32> to vector<2x32xf32>
    %c0_66 = arith.constant 0 : index
    %c256_67 = arith.constant 256 : index
    %109 = vector.load %arg15[%c0_66, %c256_67] : memref<2x512xf32, #tpu.memory_space<vmem>>, vector<2x32xf32>
    tpu.vector_store %arg15[%c0_66, %c256_67], %108 {strides = array<i32>} : memref<2x512xf32, #tpu.memory_space<vmem>>, vector<2x32xf32>,
    %110 = vector.extract_strided_slice %91 {offsets = [18, 0], sizes = [2, 32], strides = [1, 1]} : vector<32x32xf32> to vector<2x32xf32>
    %c0_68 = arith.constant 0 : index
    %c288 = arith.constant 288 : index
    %111 = vector.load %arg15[%c0_68, %c288] : memref<2x512xf32, #tpu.memory_space<vmem>>, vector<2x32xf32>
    tpu.vector_store %arg15[%c0_68, %c288], %110 {strides = array<i32>} : memref<2x512xf32, #tpu.memory_space<vmem>>, vector<2x32xf32>,
    %112 = vector.extract_strided_slice %91 {offsets = [20, 0], sizes = [2, 32], strides = [1, 1]} : vector<32x32xf32> to vector<2x32xf32>
    %c0_69 = arith.constant 0 : index
    %c320 = arith.constant 320 : index
    %113 = vector.load %arg15[%c0_69, %c320] : memref<2x512xf32, #tpu.memory_space<vmem>>, vector<2x32xf32>
    tpu.vector_store %arg15[%c0_69, %c320], %112 {strides = array<i32>} : memref<2x512xf32, #tpu.memory_space<vmem>>, vector<2x32xf32>,
    %114 = vector.extract_strided_slice %91 {offsets = [22, 0], sizes = [2, 32], strides = [1, 1]} : vector<32x32xf32> to vector<2x32xf32>
    %c0_70 = arith.constant 0 : index
    %c352 = arith.constant 352 : index
    %115 = vector.load %arg15[%c0_70, %c352] : memref<2x512xf32, #tpu.memory_space<vmem>>, vector<2x32xf32>
    tpu.vector_store %arg15[%c0_70, %c352], %114 {strides = array<i32>} : memref<2x512xf32, #tpu.memory_space<vmem>>, vector<2x32xf32>,
    %116 = vector.extract_strided_slice %91 {offsets = [24, 0], sizes = [2, 32], strides = [1, 1]} : vector<32x32xf32> to vector<2x32xf32>
    %c0_71 = arith.constant 0 : index
    %c384 = arith.constant 384 : index
    %117 = vector.load %arg15[%c0_71, %c384] : memref<2x512xf32, #tpu.memory_space<vmem>>, vector<2x32xf32>
    tpu.vector_store %arg15[%c0_71, %c384], %116 {strides = array<i32>} : memref<2x512xf32, #tpu.memory_space<vmem>>, vector<2x32xf32>,
    %118 = vector.extract_strided_slice %91 {offsets = [26, 0], sizes = [2, 32], strides = [1, 1]} : vector<32x32xf32> to vector<2x32xf32>
    %c0_72 = arith.constant 0 : index
    %c416 = arith.constant 416 : index
    %119 = vector.load %arg15[%c0_72, %c416] : memref<2x512xf32, #tpu.memory_space<vmem>>, vector<2x32xf32>
    tpu.vector_store %arg15[%c0_72, %c416], %118 {strides = array<i32>} : memref<2x512xf32, #tpu.memory_space<vmem>>, vector<2x32xf32>,
    %120 = vector.extract_strided_slice %91 {offsets = [28, 0], sizes = [2, 32], strides = [1, 1]} : vector<32x32xf32> to vector<2x32xf32>
    %c0_73 = arith.constant 0 : index
    %c448 = arith.constant 448 : index
    %121 = vector.load %arg15[%c0_73, %c448] : memref<2x512xf32, #tpu.memory_space<vmem>>, vector<2x32xf32>
    tpu.vector_store %arg15[%c0_73, %c448], %120 {strides = array<i32>} : memref<2x512xf32, #tpu.memory_space<vmem>>, vector<2x32xf32>,
    %122 = vector.extract_strided_slice %91 {offsets = [30, 0], sizes = [2, 32], strides = [1, 1]} : vector<32x32xf32> to vector<2x32xf32>
    %c0_74 = arith.constant 0 : index
    %c480 = arith.constant 480 : index
    %123 = vector.load %arg15[%c0_74, %c480] : memref<2x512xf32, #tpu.memory_space<vmem>>, vector<2x32xf32>
    tpu.vector_store %arg15[%c0_74, %c480], %122 {strides = array<i32>} : memref<2x512xf32, #tpu.memory_space<vmem>>, vector<2x32xf32>,
    %c0_75 = arith.constant 0 : index
    %c0_76 = arith.constant 0 : index
    %124 = vector.load %arg15[%c0_75, %c0_76] : memref<2x512xf32, #tpu.memory_space<vmem>>, vector<2x512xf32>
    %125 = arith.truncf %124 : vector<2x512xf32> to vector<2x512xbf16>
    %c0_77 = arith.constant 0 : index
    %c0_78 = arith.constant 0 : index
    %126 = vector.load %arg9[%c0_77, %c0_78] : memref<512x32xbf16, #tpu.memory_space<vmem>>, vector<512x32xbf16>
    %cst_79 = arith.constant dense<0.000000e+00> : vector<2x32xf32>
    %127 = tpu.matmul %125, %126, %cst_79 {dimension_numbers = #tpu.dot_dimension_numbers<[1], [0], [0], [1], [0, 0, 1, 1], [], []>} : vector<2x512xbf16>, vector<512x32xbf16>, vector<2x32xf32> -> vector<2x32xf32>
    %c0_80 = arith.constant 0 : index
    %c0_81 = arith.constant 0 : index
    %128 = vector.load %arg10[%c0_80, %c0_81] : memref<1x32xf32, #tpu.memory_space<vmem>>, vector<1x32xf32>
    %129 = vector.broadcast %128 : vector<1x32xf32> to vector<2x32xf32>
    %130 = arith.addf %127, %129 : vector<2x32xf32>
    %cst_82 = arith.constant 0.000000e+00 : f32
    %131 = vector.broadcast %cst_82 : f32 to vector<2x32xf32>
    %132 = arith.cmpf ogt, %130, %131 : vector<2x32xf32>
    %cst_83 = arith.constant 2.000000e-01 : f32
    %133 = vector.broadcast %cst_83 : f32 to vector<2x32xf32>
    %134 = arith.mulf %133, %130 : vector<2x32xf32>
    %135 = arith.select %132, %130, %134 : vector<2x32xi1>, vector<2x32xf32>
    %136 = arith.truncf %135 : vector<2x32xf32> to vector<2x32xbf16>
    %c0_84 = arith.constant 0 : index
    %c0_85 = arith.constant 0 : index
    %137 = vector.load %arg11[%c0_84, %c0_85] : memref<32x1xbf16, #tpu.memory_space<vmem>>, vector<32x1xbf16>
    %cst_86 = arith.constant dense<0.000000e+00> : vector<2x1xf32>
    %138 = tpu.matmul %136, %137, %cst_86 {dimension_numbers = #tpu.dot_dimension_numbers<[1], [0], [0], [1], [0, 0, 1, 1], [], []>} : vector<2x32xbf16>, vector<32x1xbf16>, vector<2x1xf32> -> vector<2x1xf32>
    %c0_87 = arith.constant 0 : index
    %c0_88 = arith.constant 0 : index
    %139 = vector.load %arg12[%c0_87, %c0_88] : memref<1x1xf32, #tpu.memory_space<vmem>>, vector<1x1xf32>
    %140 = vector.broadcast %139 : vector<1x1xf32> to vector<2x1xf32>
    %141 = arith.addf %138, %140 : vector<2x1xf32>
    %cst_89 = arith.constant 0.000000e+00 : f32
    %142 = vector.broadcast %cst_89 : f32 to vector<2x1xf32>
    %143 = arith.subf %142, %141 : vector<2x1xf32>
    %144 = math.exp %143 : vector<2x1xf32>
    %cst_90 = arith.constant 1.000000e+00 : f32
    %145 = vector.broadcast %cst_90 : f32 to vector<2x1xf32>
    %146 = arith.addf %145, %144 : vector<2x1xf32>
    %147 = tpu.reciprocal %146 {approx = true} : vector<2x1xf32> -> vector<2x1xf32>
    %c0_91 = arith.constant 0 : index
    %c0_92 = arith.constant 0 : index
    %148 = vector.load %arg13[%c0_91, %c0_92] : memref<2x1xf32, #tpu.memory_space<vmem>>, vector<2x1xf32>
    tpu.vector_store %arg13[%c0_91, %c0_92], %147 {strides = array<i32>} : memref<2x1xf32, #tpu.memory_space<vmem>>, vector<2x1xf32>,
    return
  }
  func.func @transform_0(%arg0: i32) -> (i32, i32) {
    %c0_i32 = arith.constant 0 : i32
    %c0_i32_0 = arith.constant 0 : i32
    %c0_i32_1 = arith.constant 0 : i32
    return %c0_i32, %c0_i32_0 : i32, i32
  }
  func.func @transform_1(%arg0: i32) -> (i32, i32) {
    %c0_i32 = arith.constant 0 : i32
    %c0_i32_0 = arith.constant 0 : i32
    %c0_i32_1 = arith.constant 0 : i32
    return %c0_i32, %c0_i32_0 : i32, i32
  }
  func.func @transform_2(%arg0: i32) -> (i32, i32) {
    %c0_i32 = arith.constant 0 : i32
    %c0_i32_0 = arith.constant 0 : i32
    %c0_i32_1 = arith.constant 0 : i32
    return %c0_i32, %c0_i32_0 : i32, i32
  }
  func.func @transform_3(%arg0: i32) -> (i32, i32) {
    %c0_i32 = arith.constant 0 : i32
    %c0_i32_0 = arith.constant 0 : i32
    %c0_i32_1 = arith.constant 0 : i32
    return %c0_i32, %c0_i32_0 : i32, i32
  }
  func.func @transform_4(%arg0: i32) -> (i32, i32) {
    %c0_i32 = arith.constant 0 : i32
    %c0_i32_0 = arith.constant 0 : i32
    %c0_i32_1 = arith.constant 0 : i32
    return %c0_i32, %c0_i32_0 : i32, i32
  }
  func.func @transform_5(%arg0: i32) -> (i32, i32) {
    %c0_i32 = arith.constant 0 : i32
    %c0_i32_0 = arith.constant 0 : i32
    %c0_i32_1 = arith.constant 0 : i32
    return %c0_i32, %c0_i32_0 : i32, i32
  }
  func.func @transform_6(%arg0: i32) -> (i32, i32) {
    %c0_i32 = arith.constant 0 : i32
    %c0_i32_0 = arith.constant 0 : i32
    %c0_i32_1 = arith.constant 0 : i32
    return %c0_i32, %c0_i32_0 : i32, i32
  }
  func.func @transform_7(%arg0: i32) -> (i32, i32) {
    %c0_i32 = arith.constant 0 : i32
    %c0_i32_0 = arith.constant 0 : i32
    %c0_i32_1 = arith.constant 0 : i32
    return %c0_i32, %c0_i32_0 : i32, i32
  }
  func.func @transform_8(%arg0: i32) -> (i32, i32) {
    %c0_i32 = arith.constant 0 : i32
    %c0_i32_0 = arith.constant 0 : i32
    %c0_i32_1 = arith.constant 0 : i32
    return %c0_i32, %c0_i32_0 : i32, i32
  }
  func.func @transform_9(%arg0: i32) -> (i32, i32) {
    %c0_i32 = arith.constant 0 : i32
    %c0_i32_0 = arith.constant 0 : i32
    %c0_i32_1 = arith.constant 0 : i32
    return %c0_i32, %c0_i32_0 : i32, i32
  }
  func.func @transform_10(%arg0: i32) -> (i32, i32) {
    %c0_i32 = arith.constant 0 : i32
    %c0_i32_0 = arith.constant 0 : i32
    %c0_i32_1 = arith.constant 0 : i32
    return %c0_i32, %c0_i32_0 : i32, i32
  }
  func.func @transform_11(%arg0: i32) -> (i32, i32) {
    %c0_i32 = arith.constant 0 : i32
    %c0_i32_0 = arith.constant 0 : i32
    %c0_i32_1 = arith.constant 0 : i32
    return %c0_i32, %c0_i32_0 : i32, i32
  }
  func.func @transform_12(%arg0: i32) -> (i32, i32) {
    %c0_i32 = arith.constant 0 : i32
    %c0_i32_0 = arith.constant 0 : i32
    %c0_i32_1 = arith.constant 0 : i32
    return %c0_i32, %c0_i32_0 : i32, i32
  }
}

</mosaic_0001>

<llo_original>
// kernel: squeeze.3
$region0: #{squeeze.3}
  %s0 = inlined_call_operand.vmem [shape: bf16[3,3,32], index: 0, kind: input, shape index: {}]
  %s1 = inlined_call_operand.vmem [shape: bf16[9,32], index: 1, kind: output, shape index: {}]
  $region1: #{squeeze.3} parent=0
    #allocation0 [shape = 'u8[8192]{0}', space=vmem, size = 0x2000, scoped, tag = 'scoped mem for output reshape']
    #allocation1 [shape = 'u8[12288]{0}', space=vmem, size = 0x3000, scoped, tag = 'scoped mem for input reshape']
    %s3 = smul.u32 2, 2
    %s4 = sshllo.u32 0, %s3
    %s5 = smul.addr 2, 2
    %s6 = scalar_lea.vmem %s0, %s5
    %s7 = sshrl.u32 %s4, 1
    %s8 = sor.u32 %s4, %s7
    %s9 = sand.u32 %s8, 85
    %s10 = sshrl.u32 %s9, 1
    %s11 = sor.u32 %s9, %s10
    %s12 = sand.u32 51, %s11
    %s13 = sshrl.u32 %s12, 2
    %s14 = sor.u32 %s12, %s13
    %s15 = sand.u32 15, %s14
    %v16 = vld [vmem:[%s6] sm:%s15]
    %v17 = vunpack.c.l.bf16 %v16
    %v18 = vunpack.c.h.bf16 %v16
    %s19 = scalar_lea.vmem [#allocation1], 16
    %20 = vst [vmem:[%s19] sm:%s4] %v17
    %s21 = scalar_lea.vmem %s0, 2
    %s22 = sshrl.u32 %s4, 1
    %s23 = sor.u32 %s4, %s22
    %s24 = sand.u32 %s23, 85
    %s25 = sshrl.u32 %s24, 1
    %s26 = sor.u32 %s24, %s25
    %s27 = sand.u32 51, %s26
    %s28 = sshrl.u32 %s27, 2
    %s29 = sor.u32 %s27, %s28
    %s30 = sand.u32 15, %s29
    %v31 = vld [vmem:[%s21] sm:%s30]
    %v32 = vunpack.c.l.bf16 %v31
    %v33 = vunpack.c.h.bf16 %v31
    %s34 = scalar_lea.vmem [#allocation1], 8
    %35 = vst [vmem:[%s34] sm:%s4] %v32
    %s36 = sshrl.u32 %s4, 1
    %s37 = sor.u32 %s4, %s36
    %s38 = sand.u32 %s37, 85
    %s39 = sshrl.u32 %s38, 1
    %s40 = sor.u32 %s38, %s39
    %s41 = sand.u32 51, %s40
    %s42 = sshrl.u32 %s41, 2
    %s43 = sor.u32 %s41, %s42
    %s44 = sand.u32 15, %s43
    %v45 = vld [vmem:[%s0] sm:%s44]
    %v46 = vunpack.c.l.bf16 %v45
    %v47 = vunpack.c.h.bf16 %v45
    %48 = vst [vmem:[#allocation1] sm:%s4] %v46
    %v49 = vld [vmem:[#allocation1] sm:$0x7]
    %vm50 = vcmask 261120
    %51 = vst.msk [vmem:[#allocation0] sm:$0x7] %vm50, %v49
    %s52 = scalar_lea.vmem [#allocation1], 8
    %v53 = vld [vmem:[%s52] sm:$0x7]
    %vm54 = vcmask 261120
    %s55 = scalar_lea.vmem [#allocation0], 3
    %56 = vst.msk [vmem:[%s55] sm:$0x7] %vm54, %v53
    %s57 = scalar_lea.vmem [#allocation1], 16
    %v58 = vld [vmem:[%s57] sm:$0x7]
    %vm59 = vcmask 261120
    %s60 = scalar_lea.vmem [#allocation0], 6
    %61 = vst.msk [vmem:[%s60] sm:$0x7] %vm59, %v58
    %s63 = smul.u32 4, 2
    %s64 = sshllo.u32 0, %s63
    %s65 = sshrl.u32 %s63, 1
    %v66 = vld [vmem:[#allocation0] sm:%s64]
    %v67 = vpack.c.bf16 0.0, %v66
    %s68 = sshllo.u32 0, %s65
    %69 = vst [vmem:[%s1] sm:%s68] %v67
    %s70 = scalar_lea.vmem [#allocation0], 8
    %v71 = vld [vmem:[%s70] sm:%s64]
    %v72 = vpack.c.bf16 0.0, %v71
    %s73 = sshllo.u32 0, %s65
    %s74 = scalar_lea.vmem %s1, 4
    %75 = vst [vmem:[%s74] sm:%s73] %v72

// kernel: discriminator_forward.1
$region0: #{discriminator_forward.1}
  #allocation0 [shape = 'u32[]', space=smem, size = 0x4, offset = 0x4, fixed_abs, tag = 'smem constant byte address 0x4 - core index']
  #allocation1 [shape = 'u32[144,128]{1,0:T(1,128)}', space=vmem, size = 0x12000, scoped, tag = 'internal scratch']
  #allocation2 [shape = 'f32[32,288]{1,0:T(8,128)}', space=vmem, size = 0xc000, scoped, tag = 'scratch operand']
  #allocation3 [shape = 'f32[2,512]{1,0:T(2,128)}', space=vmem, size = 0x1000, scoped, tag = 'scratch operand']
  #allocation4 [shape = 'f32[1,1]{1,0:T(1,128)S(1)}', space=vmem, size = 0x200, scoped, tag = 'scoped memory for discriminator_forward.1']
  %s0 = inlined_call_operand.vmem [shape: bf16[32,8], index: 0, kind: input, shape index: {}]
  %s1 = inlined_call_operand.vmem [shape: bf16[8,32], index: 1, kind: input, shape index: {}]
  %s2 = inlined_call_operand.vmem [shape: f32[1,32], index: 2, kind: input, shape index: {}]
  %s3 = inlined_call_operand.vmem [shape: f32[16,32], index: 3, kind: input, shape index: {}]
  %s4 = inlined_call_operand.vmem [shape: f32[32,9], index: 4, kind: input, shape index: {}]
  %s5 = inlined_call_operand.vmem [shape: bf16[288,32], index: 5, kind: input, shape index: {}]
  %s6 = inlined_call_operand.vmem [shape: f32[32,32], index: 6, kind: input, shape index: {}]
  %s7 = inlined_call_operand.vmem [shape: f32[1,32], index: 7, kind: input, shape index: {}]
  %s8 = inlined_call_operand.vmem [shape: bf16[512,32], index: 8, kind: input, shape index: {}]
  %s9 = inlined_call_operand.vmem [shape: f32[1,32], index: 9, kind: input, shape index: {}]
  %s10 = inlined_call_operand.vmem [shape: bf16[32,1], index: 10, kind: input, shape index: {}]
  %s11 = inlined_call_operand.<no memory space> [shape: f32[1,1], index: 11, kind: input, shape index: {}]
  %s12 = inlined_call_operand.vmem [shape: f32[2,1], index: 12, kind: output, shape index: {}]
  %s13 = sld [smem:[#allocation0]]
  $region58: #{discriminator_forward.1} parent=0
    _
  %s15 = ssub.s32 1, %s13
  %s16 = scalar_select 0, %s15, %s13
  %v17 = vstv %s11
  %18 = vst [vmem:[#allocation4] sm:$0x1] %v17
  // Predicated region
  $region2: #{discriminator_forward.1} parent=0 // pred_check
    _
  $region3: #{discriminator_forward.1} parent=0 // pred_check_branch
    %20 = sbr.rel (0) target = $region5
  $region4: #{discriminator_forward.1} parent=0 // pred_region
    _
  $region5: #{discriminator_forward.1} parent=0 // pred_fallthru
    _
  // Predicated region
  $region6: #{discriminator_forward.1} parent=0 // pred_check
    _
  $region7: #{discriminator_forward.1} parent=0 // pred_check_branch
    %22 = sbr.rel (0) target = $region9
  $region8: #{discriminator_forward.1} parent=0 // pred_region
    _
  $region9: #{discriminator_forward.1} parent=0 // pred_fallthru
    _
  // Predicated region
  $region10: #{discriminator_forward.1} parent=0 // pred_check
    _
  $region11: #{discriminator_forward.1} parent=0 // pred_check_branch
    %24 = sbr.rel (0) target = $region13
  $region12: #{discriminator_forward.1} parent=0 // pred_region
    _
  $region13: #{discriminator_forward.1} parent=0 // pred_fallthru
    _
  // Predicated region
  $region14: #{discriminator_forward.1} parent=0 // pred_check
    _
  $region15: #{discriminator_forward.1} parent=0 // pred_check_branch
    %26 = sbr.rel (0) target = $region17
  $region16: #{discriminator_forward.1} parent=0 // pred_region
    _
  $region17: #{discriminator_forward.1} parent=0 // pred_fallthru
    _
  // Predicated region
  $region18: #{discriminator_forward.1} parent=0 // pred_check
    _
  $region19: #{discriminator_forward.1} parent=0 // pred_check_branch
    %28 = sbr.rel (0) target = $region21
  $region20: #{discriminator_forward.1} parent=0 // pred_region
    _
  $region21: #{discriminator_forward.1} parent=0 // pred_fallthru
    _
  // Predicated region
  $region22: #{discriminator_forward.1} parent=0 // pred_check
    _
  $region23: #{discriminator_forward.1} parent=0 // pred_check_branch
    %30 = sbr.rel (0) target = $region25
  $region24: #{discriminator_forward.1} parent=0 // pred_region
    _
  $region25: #{discriminator_forward.1} parent=0 // pred_fallthru
    _
  // Predicated region
  $region26: #{discriminator_forward.1} parent=0 // pred_check
    _
  $region27: #{discriminator_forward.1} parent=0 // pred_check_branch
    %32 = sbr.rel (0) target = $region29
  $region28: #{discriminator_forward.1} parent=0 // pred_region
    _
  $region29: #{discriminator_forward.1} parent=0 // pred_fallthru
    _
  // Predicated region
  $region30: #{discriminator_forward.1} parent=0 // pred_check
    _
  $region31: #{discriminator_forward.1} parent=0 // pred_check_branch
    %34 = sbr.rel (0) target = $region33
  $region32: #{discriminator_forward.1} parent=0 // pred_region
    _
  $region33: #{discriminator_forward.1} parent=0 // pred_fallthru
    _
  // Predicated region
  $region34: #{discriminator_forward.1} parent=0 // pred_check
    _
  $region35: #{discriminator_forward.1} parent=0 // pred_check_branch
    %36 = sbr.rel (0) target = $region37
  $region36: #{discriminator_forward.1} parent=0 // pred_region
    _
  $region37: #{discriminator_forward.1} parent=0 // pred_fallthru
    _
  // Predicated region
  $region38: #{discriminator_forward.1} parent=0 // pred_check
    _
  $region39: #{discriminator_forward.1} parent=0 // pred_check_branch
    %38 = sbr.rel (0) target = $region41
  $region40: #{discriminator_forward.1} parent=0 // pred_region
    _
  $region41: #{discriminator_forward.1} parent=0 // pred_fallthru
    _
  // Predicated region
  $region42: #{discriminator_forward.1} parent=0 // pred_check
    _
  $region43: #{discriminator_forward.1} parent=0 // pred_check_branch
    %40 = sbr.rel (0) target = $region45
  $region44: #{discriminator_forward.1} parent=0 // pred_region
    _
  $region45: #{discriminator_forward.1} parent=0 // pred_fallthru
    _
  // Predicated region
  $region46: #{discriminator_forward.1} parent=0 // pred_check
    _
  $region47: #{discriminator_forward.1} parent=0 // pred_check_branch
    %42 = sbr.rel (0) target = $region49
  $region48: #{discriminator_forward.1} parent=0 // pred_region
    _
  $region49: #{discriminator_forward.1} parent=0 // pred_fallthru
    _
  %v44 = vld [vmem:[%s0] sm:$0xf]
  %v45 = vld [vmem:[%s0 + $0x4] sm:$0xf]
  %v46 = vld [vmem:[%s0 + $0x8] sm:$0xf]
  %v47 = vld [vmem:[%s0 + $0xc] sm:$0xf]
  %v48 = vld [vmem:[%s1] sm:$0xf]
  %v49 = vld [vmem:[%s2] sm:$0x1]
  %v51 = vlaneseq
  %v52 = vshrl.u32 %v51, 7
  %v53 = vsub.s32 0, %v52
  %v54 = vrot.slane %v49, %v53
  %v60 = vunpack.c.l.b16 %v44
  %v61 = vunpack.c.l.b16 %v45
  %v62 = vunpack.c.l.b16 %v46
  %v63 = vunpack.c.l.b16 %v47
  %v64 = vpack.c.b16 %v61, %v60
  %v65 = vpack.c.b16 %v63, %v62
  %vm66 = vcmask 64512
  %v68 = vsel %vm66, %v64, 0
  %v71 = vsel %vm66, %v65, 0
  %vm73 = vcmask 1043456
  %v75 = vsel %vm73, %v48, 0
  %77 = vmatprep.subr.bf16.mxu0 0
  %78 = vmatpush1.bf16.msra.mxu0 %v75
  %79 = vmatprep.subr.bf16.mxu0 0
  %80 = vmatpush1.bf16.msra.mxu0 0
  %81 = vmatprep.subr.bf16.mxu0 0
  %82 = vmatpush1.bf16.msra.mxu0 0
  %83 = vmatprep.subr.bf16.mxu0 0
  %84 = vmatpush1.bf16.msra.mxu0 0
  %85 = vmatprep.subr.bf16.mxu0 0
  %86 = vmatpush1.bf16.msra.mxu0 0
  %87 = vmatprep.subr.bf16.mxu0 0
  %88 = vmatpush1.bf16.msra.mxu0 0
  %89 = vmatprep.subr.bf16.mxu0 0
  %90 = vmatpush1.bf16.msra.mxu0 0
  %91 = vmatprep.subr.bf16.mxu0 0
  %92 = vmatpush1.bf16.msra.mxu0 0
  %93 = vmatprep.subr.bf16.mxu0 0
  %94 = vmatpush1.bf16.msra.mxu0 0
  %95 = vmatprep.subr.bf16.mxu0 0
  %96 = vmatpush1.bf16.msra.mxu0 0
  %97 = vmatprep.subr.bf16.mxu0 0
  %98 = vmatpush1.bf16.msra.mxu0 0
  %99 = vmatprep.subr.bf16.mxu0 0
  %100 = vmatpush1.bf16.msra.mxu0 0
  %101 = vmatprep.subr.bf16.mxu0 0
  %102 = vmatpush1.bf16.msra.mxu0 0
  %103 = vmatprep.subr.bf16.mxu0 0
  %104 = vmatpush1.bf16.msra.mxu0 0
  %105 = vmatprep.subr.bf16.mxu0 0
  %106 = vmatpush1.bf16.msra.mxu0 0
  %107 = vmatprep.subr.bf16.mxu0 0
  %108 = vmatpush1.bf16.msra.mxu0 0
  %109 = vmatprep.mubr.bf16.mxu0 0
  %110 = vmatmul.mubr.bf16.gmra.mrb[0].mxu0 %v68
  %v111 = vpop.f32.mrb[0].mxu0
  %v112 = vadd.f32 %v54, %v111
  %v113 = vpop.f32.mrb[0].mxu0
  %v114 = vpop.f32.mrb[0].mxu0
  %v115 = vadd.f32 %v54, %v114
  %v116 = vpop.f32.mrb[0].mxu0
  %117 = vmatprep.mubr.bf16.mxu0 0
  %118 = vmatmul.mubr.bf16.gmra.mrb[0].mxu0 %v71
  %v119 = vpop.f32.mrb[0].mxu0
  %v120 = vadd.f32 %v54, %v119
  %v121 = vpop.f32.mrb[0].mxu0
  %v122 = vpop.f32.mrb[0].mxu0
  %v123 = vadd.f32 %v54, %v122
  %v124 = vpop.f32.mrb[0].mxu0
  %125 = vdwg.mxu0
  %vm126 = vcmp.gt.f32.partialorder %v112, 0.0
  %vm127 = vcmp.gt.f32.partialorder %v115, 0.0
  %vm128 = vcmp.gt.f32.partialorder %v120, 0.0
  %vm129 = vcmp.gt.f32.partialorder %v123, 0.0
  %v130 = vmul.f32 %v112, 0.2
  %v131 = vmul.f32 %v115, 0.2
  %v132 = vmul.f32 %v120, 0.2
  %v133 = vmul.f32 %v123, 0.2
  %v134 = vsel %vm126, %v112, %v130
  %v135 = vsel %vm127, %v115, %v131
  %v136 = vsel %vm128, %v120, %v132
  %v137 = vsel %vm129, %v123, %v133
  %v138 = vld [vmem:[%s3] sm:$0xff]
  %v139 = vld [vmem:[%s3 + $0x8] sm:$0xff]
  %vm140 = vcmask 261120
  %v142 = vsel %vm140, %v138, 0
  %v145 = vsel %vm140, %v139, 0
  %147 = vmatprep.subr.mxu0 0.0
  %148 = vmatpush1.msra.mxu0 %v134
  %149 = vmatprep.subr.mxu0 0.0
  %150 = vmatpush1.msra.mxu0 %v135
  %151 = vmatprep.subr.mxu0 0.0
  %152 = vmatpush1.msra.mxu0 %v136
  %153 = vmatprep.subr.mxu0 0.0
  %154 = vmatpush1.msra.mxu0 %v137
  %155 = vmatprep.subr.mxu0 0.0
  %156 = vmatpush1.msra.mxu0 0.0
  %157 = vmatprep.subr.mxu0 0.0
  %158 = vmatpush1.msra.mxu0 0.0
  %159 = vmatprep.subr.mxu0 0.0
  %160 = vmatpush1.msra.mxu0 0.0
  %161 = vmatprep.subr.mxu0 0.0
  %162 = vmatpush1.msra.mxu0 0.0
  %163 = vmatprep.subr.mxu0 0.0
  %164 = vmatpush1.msra.mxu0 0.0
  %165 = vmatprep.subr.mxu0 0.0
  %166 = vmatpush1.msra.mxu0 0.0
  %167 = vmatprep.subr.mxu0 0.0
  %168 = vmatpush1.msra.mxu0 0.0
  %169 = vmatprep.subr.mxu0 0.0
  %170 = vmatpush1.msra.mxu0 0.0
  %171 = vmatprep.subr.mxu0 0.0
  %172 = vmatpush1.msra.mxu0 0.0
  %173 = vmatprep.subr.mxu0 0.0
  %174 = vmatpush1.msra.mxu0 0.0
  %175 = vmatprep.subr.mxu0 0.0
  %176 = vmatpush1.msra.mxu0 0.0
  %177 = vmatprep.subr.mxu0 0.0
  %178 = vmatpush1.msra.mxu0 0.0
  %179 = vmatprep.subr.mxu0 0.0
  %180 = vmatpush1.msra.mxu0 0.0
  %181 = vmatprep.subr.mxu0 0.0
  %182 = vmatpush1.msra.mxu0 0.0
  %183 = vmatprep.subr.mxu0 0.0
  %184 = vmatpush1.msra.mxu0 0.0
  %185 = vmatprep.subr.mxu0 0.0
  %186 = vmatpush1.msra.mxu0 0.0
  %187 = vmatprep.subr.mxu0 0.0
  %188 = vmatpush1.msra.mxu0 0.0
  %189 = vmatprep.subr.mxu0 0.0
  %190 = vmatpush1.msra.mxu0 0.0
  %191 = vmatprep.subr.mxu0 0.0
  %192 = vmatpush1.msra.mxu0 0.0
  %193 = vmatprep.subr.mxu0 0.0
  %194 = vmatpush1.msra.mxu0 0.0
  %195 = vmatprep.subr.mxu0 0.0
  %196 = vmatpush1.msra.mxu0 0.0
  %197 = vmatprep.subr.mxu0 0.0
  %198 = vmatpush1.msra.mxu0 0.0
  %199 = vmatprep.subr.mxu0 0.0
  %200 = vmatpush1.msra.mxu0 0.0
  %201 = vmatprep.subr.mxu0 0.0
  %202 = vmatpush1.msra.mxu0 0.0
  %203 = vmatprep.subr.mxu0 0.0
  %204 = vmatpush1.msra.mxu0 0.0
  %205 = vmatprep.subr.mxu0 0.0
  %206 = vmatpush1.msra.mxu0 0.0
  %207 = vmatprep.subr.mxu0 0.0
  %208 = vmatpush1.msra.mxu0 0.0
  %209 = vmatprep.subr.mxu0 0.0
  %210 = vmatpush1.msra.mxu0 0.0
  %211 = vmatprep.mubr.f32.mxu0 0.0
  %212 = vmatmul.mubr.f32.gmra.mrb[0].mxu0 %v142
  %v213 = vpop.f32.mrb[0].mxu0
  %v214 = vadd.f32 0.0, %v213
  %v215 = vpop.f32.mrb[0].mxu0
  %216 = vmatprep.mubr.f32.mxu0 0.0
  %217 = vmatmul.mubr.f32.gmra.mrb[0].mxu0 %v145
  %v218 = vpop.f32.mrb[0].mxu0
  %v219 = vadd.f32 0.0, %v218
  %v220 = vpop.f32.mrb[0].mxu0
  %221 = vdwg.mxu0
  %v222 = vmul.f32 %v134, %v134
  %v223 = vmul.f32 %v135, %v135
  %v224 = vmul.f32 %v136, %v136
  %v225 = vmul.f32 %v137, %v137
  %226 = vmatprep.subr.mxu0 0.0
  %227 = vmatpush1.msra.mxu0 %v222
  %228 = vmatprep.subr.mxu0 0.0
  %229 = vmatpush1.msra.mxu0 %v223
  %230 = vmatprep.subr.mxu0 0.0
  %231 = vmatpush1.msra.mxu0 %v224
  %232 = vmatprep.subr.mxu0 0.0
  %233 = vmatpush1.msra.mxu0 %v225
  %234 = vmatprep.subr.mxu0 0.0
  %235 = vmatpush1.msra.mxu0 0.0
  %236 = vmatprep.subr.mxu0 0.0
  %237 = vmatpush1.msra.mxu0 0.0
  %238 = vmatprep.subr.mxu0 0.0
  %239 = vmatpush1.msra.mxu0 0.0
  %240 = vmatprep.subr.mxu0 0.0
  %241 = vmatpush1.msra.mxu0 0.0
  %242 = vmatprep.subr.mxu0 0.0
  %243 = vmatpush1.msra.mxu0 0.0
  %244 = vmatprep.subr.mxu0 0.0
  %245 = vmatpush1.msra.mxu0 0.0
  %246 = vmatprep.subr.mxu0 0.0
  %247 = vmatpush1.msra.mxu0 0.0
  %248 = vmatprep.subr.mxu0 0.0
  %249 = vmatpush1.msra.mxu0 0.0
  %250 = vmatprep.subr.mxu0 0.0
  %251 = vmatpush1.msra.mxu0 0.0
  %252 = vmatprep.subr.mxu0 0.0
  %253 = vmatpush1.msra.mxu0 0.0
  %254 = vmatprep.subr.mxu0 0.0
  %255 = vmatpush1.msra.mxu0 0.0
  %256 = vmatprep.subr.mxu0 0.0
  %257 = vmatpush1.msra.mxu0 0.0
  %258 = vmatprep.subr.mxu0 0.0
  %259 = vmatpush1.msra.mxu0 0.0
  %260 = vmatprep.subr.mxu0 0.0
  %261 = vmatpush1.msra.mxu0 0.0
  %262 = vmatprep.subr.mxu0 0.0
  %263 = vmatpush1.msra.mxu0 0.0
  %264 = vmatprep.subr.mxu0 0.0
  %265 = vmatpush1.msra.mxu0 0.0
  %266 = vmatprep.subr.mxu0 0.0
  %267 = vmatpush1.msra.mxu0 0.0
  %268 = vmatprep.subr.mxu0 0.0
  %269 = vmatpush1.msra.mxu0 0.0
  %270 = vmatprep.subr.mxu0 0.0
  %271 = vmatpush1.msra.mxu0 0.0
  %272 = vmatprep.subr.mxu0 0.0
  %273 = vmatpush1.msra.mxu0 0.0
  %274 = vmatprep.subr.mxu0 0.0
  %275 = vmatpush1.msra.mxu0 0.0
  %276 = vmatprep.subr.mxu0 0.0
  %277 = vmatpush1.msra.mxu0 0.0
  %278 = vmatprep.subr.mxu0 0.0
  %279 = vmatpush1.msra.mxu0 0.0
  %280 = vmatprep.subr.mxu0 0.0
  %281 = vmatpush1.msra.mxu0 0.0
  %282 = vmatprep.subr.mxu0 0.0
  %283 = vmatpush1.msra.mxu0 0.0
  %284 = vmatprep.subr.mxu0 0.0
  %285 = vmatpush1.msra.mxu0 0.0
  %286 = vmatprep.subr.mxu0 0.0
  %287 = vmatpush1.msra.mxu0 0.0
  %288 = vmatprep.subr.mxu0 0.0
  %289 = vmatpush1.msra.mxu0 0.0
  %290 = vmatprep.mubr.f32.mxu0 0.0
  %291 = vmatmul.mubr.f32.gmra.mrb[0].mxu0 %v142
  %v292 = vpop.f32.mrb[0].mxu0
  %v293 = vadd.f32 0.0, %v292
  %v294 = vpop.f32.mrb[0].mxu0
  %295 = vmatprep.mubr.f32.mxu0 0.0
  %296 = vmatmul.mubr.f32.gmra.mrb[0].mxu0 %v145
  %v297 = vpop.f32.mrb[0].mxu0
  %v298 = vadd.f32 0.0, %v297
  %v299 = vpop.f32.mrb[0].mxu0
  %300 = vdwg.mxu0
  %v301 = vmul.f32 %v214, 0.5
  %v302 = vmul.f32 %v219, 0.5
  %v303 = vmul.f32 %v293, 0.5
  %v304 = vmul.f32 %v298, 0.5
  %v305 = vmul.f32 %v301, %v301
  %v306 = vmul.f32 %v302, %v302
  %v307 = vsub.f32 %v303, %v305
  %v308 = vsub.f32 %v304, %v306
  %v309 = vmax.f32 %v307, 0.0
  %v310 = vmax.f32 %v308, 0.0
  %v311 = vadd.f32 %v309, 1e-08
  %v312 = vadd.f32 %v310, 1e-08
  %v313 = vrsqrt.pop %v311
  %v314 = vmul.f32 %v311, %v313
  %vm315 = vcmp.eq.f32.partialorder %v311, inf
  %v316 = vsel %vm315, %v311, %v314
  %vm317 = vcmp.eq.f32.partialorder %v311, 0.0
  %v318 = vand.u32 %v311, 2147483648
  %v319 = vsel %vm317, %v318, %v316
  %v320 = vrsqrt.pop %v312
  %v321 = vmul.f32 %v312, %v320
  %vm322 = vcmp.eq.f32.partialorder %v312, inf
  %v323 = vsel %vm322, %v312, %v321
  %vm324 = vcmp.eq.f32.partialorder %v312, 0.0
  %v325 = vand.u32 %v312, 2147483648
  %v326 = vsel %vm324, %v325, %v323
  %v327 = vsel %vm140, %v319, 0.0
  %v328 = vsel %vm140, %v326, 0.0
  %v329 = vadd.f32 %v327, %v328
  %330 = vadd.xlane.f32.xlu0 %v329
  %v331 = vpop.xlane.xlu0 %330
  %v332 = vrot.slane %v331, 4
  %v333 = vadd.f32 %v331, %v332
  %v334 = vrot.slane %v333, 2
  %v335 = vadd.f32 %v333, %v334
  %v336 = vrot.slane %v335, 1
  %v337 = vadd.f32 %v335, %v336
  %s338 = vtos %v337
  %v339 = vrcp.pop 512.0
  %s340 = vtos %v339
  %s341 = smul.f32 %s338, %s340
  %v342 = vrot.slane %v134, 6
  %v343 = vrot.slane %v135, 6
  %v344 = vrot.slane %v136, 6
  %v345 = vrot.slane %v137, 6
  %v346 = vlaneseq
  %v347 = vshrl.u32 %v346, 7
  %vm348 = vcmp.lt.s32.totalorder %v347, 2
  %v349 = vsel %vm348, %v344, %v345
  %v350 = vsel %vm348, %v343, %v344
  %v351 = vsel %vm348, %v342, %v343
  %v352 = vsel %vm348, %v345, %v342
  %v353 = vld [vmem:[%s4] sm:$0xff]
  %v354 = vld [vmem:[%s4 + $0x8] sm:$0xff]
  %v355 = vld [vmem:[%s4 + $0x10] sm:$0xff]
  %v356 = vld [vmem:[%s4 + $0x18] sm:$0xff]
  %358 = vset.pattern.permute.xlu0 0
  %359 = vperm.xlu0 %358, %v353
  %v360 = vpop.permute.xlu0 %359
  %363 = vset.pattern.permute.xlu0 0
  %364 = vperm.xlu0 %363, %v354
  %v365 = vpop.permute.xlu0 %364
  %368 = vset.pattern.permute.xlu0 0
  %369 = vperm.xlu0 %368, %v355
  %v370 = vpop.permute.xlu0 %369
  %373 = vset.pattern.permute.xlu0 0
  %374 = vperm.xlu0 %373, %v356
  %v375 = vpop.permute.xlu0 %374
  %v377 = vmul.f32 %v349, %v360
  %v378 = vmul.f32 %v352, %v365
  %v379 = vmul.f32 %v351, %v370
  %v380 = vmul.f32 %v350, %v375
  %381 = vst.msk [vmem:[#allocation2] sm:$0xff] %vm140, %v377
  %382 = vst.msk [vmem:[#allocation2 + $0x18] sm:$0xff] %vm140, %v378
  %383 = vst.msk [vmem:[#allocation2 + $0x30] sm:$0xff] %vm140, %v379
  %384 = vst.msk [vmem:[#allocation2 + $0x48] sm:$0xff] %vm140, %v380
  %v385 = vld [vmem:[%s4] sm:$0xff]
  %v386 = vld [vmem:[%s4 + $0x8] sm:$0xff]
  %v387 = vld [vmem:[%s4 + $0x10] sm:$0xff]
  %v388 = vld [vmem:[%s4 + $0x18] sm:$0xff]
  %390 = vset.pattern.permute.xlu0 1
  %391 = vperm.xlu0 %390, %v385
  %v392 = vpop.permute.xlu0 %391
  %395 = vset.pattern.permute.xlu0 1
  %396 = vperm.xlu0 %395, %v386
  %v397 = vpop.permute.xlu0 %396
  %400 = vset.pattern.permute.xlu0 1
  %401 = vperm.xlu0 %400, %v387
  %v402 = vpop.permute.xlu0 %401
  %405 = vset.pattern.permute.xlu0 1
  %406 = vperm.xlu0 %405, %v388
  %v407 = vpop.permute.xlu0 %406
  %v409 = vmul.f32 %v137, %v392
  %v410 = vmul.f32 %v134, %v397
  %v411 = vmul.f32 %v135, %v402
  %v412 = vmul.f32 %v136, %v407
  %417 = vrot.lane.b32.xlu0 %v409, 32
  %v418 = vpop.permute.xlu0 %417
  %419 = vrot.lane.b32.xlu0 %v410, 32
  %v420 = vpop.permute.xlu0 %419
  %421 = vrot.lane.b32.xlu0 %v411, 32
  %v422 = vpop.permute.xlu0 %421
  %423 = vrot.lane.b32.xlu0 %v412, 32
  %v424 = vpop.permute.xlu0 %423
  %vm429 = vcmask 523520
  %430 = vst.msk [vmem:[#allocation2] sm:$0xff] %vm429, %v418
  %431 = vst.msk [vmem:[#allocation2 + $0x18] sm:$0xff] %vm429, %v420
  %432 = vst.msk [vmem:[#allocation2 + $0x30] sm:$0xff] %vm429, %v422
  %433 = vst.msk [vmem:[#allocation2 + $0x48] sm:$0xff] %vm429, %v424
  %v434 = vrot.slane %v134, 2
  %v435 = vrot.slane %v135, 2
  %v436 = vrot.slane %v136, 2
  %v437 = vrot.slane %v137, 2
  %vm438 = vcmp.lt.s32.totalorder %v347, 6
  %v439 = vsel %vm438, %v436, %v437
  %v440 = vsel %vm438, %v435, %v436
  %v441 = vsel %vm438, %v434, %v435
  %v442 = vsel %vm438, %v437, %v434
  %v443 = vld [vmem:[%s4] sm:$0xff]
  %v444 = vld [vmem:[%s4 + $0x8] sm:$0xff]
  %v445 = vld [vmem:[%s4 + $0x10] sm:$0xff]
  %v446 = vld [vmem:[%s4 + $0x18] sm:$0xff]
  %448 = vset.pattern.permute.xlu0 2
  %449 = vperm.xlu0 %448, %v443
  %v450 = vpop.permute.xlu0 %449
  %453 = vset.pattern.permute.xlu0 2
  %454 = vperm.xlu0 %453, %v444
  %v455 = vpop.permute.xlu0 %454
  %458 = vset.pattern.permute.xlu0 2
  %459 = vperm.xlu0 %458, %v445
  %v460 = vpop.permute.xlu0 %459
  %463 = vset.pattern.permute.xlu0 2
  %464 = vperm.xlu0 %463, %v446
  %v465 = vpop.permute.xlu0 %464
  %v467 = vmul.f32 %v442, %v450
  %v468 = vmul.f32 %v441, %v455
  %v469 = vmul.f32 %v440, %v460
  %v470 = vmul.f32 %v439, %v465
  %475 = vrot.lane.b32.xlu0 %v467, 64
  %v476 = vpop.permute.xlu0 %475
  %477 = vrot.lane.b32.xlu0 %v468, 64
  %v478 = vpop.permute.xlu0 %477
  %479 = vrot.lane.b32.xlu0 %v469, 64
  %v480 = vpop.permute.xlu0 %479
  %481 = vrot.lane.b32.xlu0 %v470, 64
  %v482 = vpop.permute.xlu0 %481
  %vm487 = vcmask 785920
  %488 = vst.msk [vmem:[#allocation2] sm:$0xff] %vm487, %v476
  %489 = vst.msk [vmem:[#allocation2 + $0x18] sm:$0xff] %vm487, %v478
  %490 = vst.msk [vmem:[#allocation2 + $0x30] sm:$0xff] %vm487, %v480
  %491 = vst.msk [vmem:[#allocation2 + $0x48] sm:$0xff] %vm487, %v482
  %v492 = vld [vmem:[%s4] sm:$0xff]
  %v493 = vld [vmem:[%s4 + $0x8] sm:$0xff]
  %v494 = vld [vmem:[%s4 + $0x10] sm:$0xff]
  %v495 = vld [vmem:[%s4 + $0x18] sm:$0xff]
  %497 = vset.pattern.permute.xlu0 3
  %498 = vperm.xlu0 %497, %v492
  %v499 = vpop.permute.xlu0 %498
  %502 = vset.pattern.permute.xlu0 3
  %503 = vperm.xlu0 %502, %v493
  %v504 = vpop.permute.xlu0 %503
  %507 = vset.pattern.permute.xlu0 3
  %508 = vperm.xlu0 %507, %v494
  %v509 = vpop.permute.xlu0 %508
  %512 = vset.pattern.permute.xlu0 3
  %513 = vperm.xlu0 %512, %v495
  %v514 = vpop.permute.xlu0 %513
  %v516 = vmul.f32 %v352, %v499
  %v517 = vmul.f32 %v351, %v504
  %v518 = vmul.f32 %v350, %v509
  %v519 = vmul.f32 %v349, %v514
  %524 = vrot.lane.b32.xlu0 %v516, 96
  %v525 = vpop.permute.xlu0 %524
  %526 = vrot.lane.b32.xlu0 %v517, 96
  %v527 = vpop.permute.xlu0 %526
  %528 = vrot.lane.b32.xlu0 %v518, 96
  %v529 = vpop.permute.xlu0 %528
  %530 = vrot.lane.b32.xlu0 %v519, 96
  %v531 = vpop.permute.xlu0 %530
  %vm536 = vcmask 1048320
  %537 = vst.msk [vmem:[#allocation2] sm:$0xff] %vm536, %v525
  %538 = vst.msk [vmem:[#allocation2 + $0x18] sm:$0xff] %vm536, %v527
  %539 = vst.msk [vmem:[#allocation2 + $0x30] sm:$0xff] %vm536, %v529
  %540 = vst.msk [vmem:[#allocation2 + $0x48] sm:$0xff] %vm536, %v531
  %v541 = vld [vmem:[%s4] sm:$0xff]
  %v542 = vld [vmem:[%s4 + $0x8] sm:$0xff]
  %v543 = vld [vmem:[%s4 + $0x10] sm:$0xff]
  %v544 = vld [vmem:[%s4 + $0x18] sm:$0xff]
  %546 = vset.pattern.permute.xlu0 4
  %547 = vperm.xlu0 %546, %v541
  %v548 = vpop.permute.xlu0 %547
  %551 = vset.pattern.permute.xlu0 4
  %552 = vperm.xlu0 %551, %v542
  %v553 = vpop.permute.xlu0 %552
  %556 = vset.pattern.permute.xlu0 4
  %557 = vperm.xlu0 %556, %v543
  %v558 = vpop.permute.xlu0 %557
  %561 = vset.pattern.permute.xlu0 4
  %562 = vperm.xlu0 %561, %v544
  %v563 = vpop.permute.xlu0 %562
  %v565 = vmul.f32 %v134, %v548
  %v566 = vmul.f32 %v135, %v553
  %v567 = vmul.f32 %v136, %v558
  %v568 = vmul.f32 %v137, %v563
  %569 = vst.msk [vmem:[#allocation2 + $0x8] sm:$0xff] %vm140, %v565
  %570 = vst.msk [vmem:[#allocation2 + $0x20] sm:$0xff] %vm140, %v566
  %571 = vst.msk [vmem:[#allocation2 + $0x38] sm:$0xff] %vm140, %v567
  %572 = vst.msk [vmem:[#allocation2 + $0x50] sm:$0xff] %vm140, %v568
  %v573 = vld [vmem:[%s4] sm:$0xff]
  %v574 = vld [vmem:[%s4 + $0x8] sm:$0xff]
  %v575 = vld [vmem:[%s4 + $0x10] sm:$0xff]
  %v576 = vld [vmem:[%s4 + $0x18] sm:$0xff]
  %578 = vset.pattern.permute.xlu0 5
  %579 = vperm.xlu0 %578, %v573
  %v580 = vpop.permute.xlu0 %579
  %583 = vset.pattern.permute.xlu0 5
  %584 = vperm.xlu0 %583, %v574
  %v585 = vpop.permute.xlu0 %584
  %588 = vset.pattern.permute.xlu0 5
  %589 = vperm.xlu0 %588, %v575
  %v590 = vpop.permute.xlu0 %589
  %593 = vset.pattern.permute.xlu0 5
  %594 = vperm.xlu0 %593, %v576
  %v595 = vpop.permute.xlu0 %594
  %v597 = vmul.f32 %v441, %v580
  %v598 = vmul.f32 %v440, %v585
  %v599 = vmul.f32 %v439, %v590
  %v600 = vmul.f32 %v442, %v595
  %605 = vrot.lane.b32.xlu0 %v597, 32
  %v606 = vpop.permute.xlu0 %605
  %607 = vrot.lane.b32.xlu0 %v598, 32
  %v608 = vpop.permute.xlu0 %607
  %609 = vrot.lane.b32.xlu0 %v599, 32
  %v610 = vpop.permute.xlu0 %609
  %611 = vrot.lane.b32.xlu0 %v600, 32
  %v612 = vpop.permute.xlu0 %611
  %617 = vst.msk [vmem:[#allocation2 + $0x8] sm:$0xff] %vm429, %v606
  %618 = vst.msk [vmem:[#allocation2 + $0x20] sm:$0xff] %vm429, %v608
  %619 = vst.msk [vmem:[#allocation2 + $0x38] sm:$0xff] %vm429, %v610
  %620 = vst.msk [vmem:[#allocation2 + $0x50] sm:$0xff] %vm429, %v612
  %v621 = vld [vmem:[%s4] sm:$0xff]
  %v622 = vld [vmem:[%s4 + $0x8] sm:$0xff]
  %v623 = vld [vmem:[%s4 + $0x10] sm:$0xff]
  %v624 = vld [vmem:[%s4 + $0x18] sm:$0xff]
  %626 = vset.pattern.permute.xlu0 6
  %627 = vperm.xlu0 %626, %v621
  %v628 = vpop.permute.xlu0 %627
  %631 = vset.pattern.permute.xlu0 6
  %632 = vperm.xlu0 %631, %v622
  %v633 = vpop.permute.xlu0 %632
  %636 = vset.pattern.permute.xlu0 6
  %637 = vperm.xlu0 %636, %v623
  %v638 = vpop.permute.xlu0 %637
  %641 = vset.pattern.permute.xlu0 6
  %642 = vperm.xlu0 %641, %v624
  %v643 = vpop.permute.xlu0 %642
  %v645 = vmul.f32 %v351, %v628
  %v646 = vmul.f32 %v350, %v633
  %v647 = vmul.f32 %v349, %v638
  %v648 = vmul.f32 %v352, %v643
  %653 = vrot.lane.b32.xlu0 %v645, 64
  %v654 = vpop.permute.xlu0 %653
  %655 = vrot.lane.b32.xlu0 %v646, 64
  %v656 = vpop.permute.xlu0 %655
  %657 = vrot.lane.b32.xlu0 %v647, 64
  %v658 = vpop.permute.xlu0 %657
  %659 = vrot.lane.b32.xlu0 %v648, 64
  %v660 = vpop.permute.xlu0 %659
  %665 = vst.msk [vmem:[#allocation2 + $0x8] sm:$0xff] %vm487, %v654
  %666 = vst.msk [vmem:[#allocation2 + $0x20] sm:$0xff] %vm487, %v656
  %667 = vst.msk [vmem:[#allocation2 + $0x38] sm:$0xff] %vm487, %v658
  %668 = vst.msk [vmem:[#allocation2 + $0x50] sm:$0xff] %vm487, %v660
  %v669 = vld [vmem:[%s4] sm:$0xff]
  %v670 = vld [vmem:[%s4 + $0x8] sm:$0xff]
  %v671 = vld [vmem:[%s4 + $0x10] sm:$0xff]
  %v672 = vld [vmem:[%s4 + $0x18] sm:$0xff]
  %674 = vset.pattern.permute.xlu0 7
  %675 = vperm.xlu0 %674, %v669
  %v676 = vpop.permute.xlu0 %675
  %679 = vset.pattern.permute.xlu0 7
  %680 = vperm.xlu0 %679, %v670
  %v681 = vpop.permute.xlu0 %680
  %684 = vset.pattern.permute.xlu0 7
  %685 = vperm.xlu0 %684, %v671
  %v686 = vpop.permute.xlu0 %685
  %689 = vset.pattern.permute.xlu0 7
  %690 = vperm.xlu0 %689, %v672
  %v691 = vpop.permute.xlu0 %690
  %v693 = vmul.f32 %v135, %v676
  %v694 = vmul.f32 %v136, %v681
  %v695 = vmul.f32 %v137, %v686
  %v696 = vmul.f32 %v134, %v691
  %701 = vrot.lane.b32.xlu0 %v693, 96
  %v702 = vpop.permute.xlu0 %701
  %703 = vrot.lane.b32.xlu0 %v694, 96
  %v704 = vpop.permute.xlu0 %703
  %705 = vrot.lane.b32.xlu0 %v695, 96
  %v706 = vpop.permute.xlu0 %705
  %707 = vrot.lane.b32.xlu0 %v696, 96
  %v708 = vpop.permute.xlu0 %707
  %713 = vst.msk [vmem:[#allocation2 + $0x8] sm:$0xff] %vm536, %v702
  %714 = vst.msk [vmem:[#allocation2 + $0x20] sm:$0xff] %vm536, %v704
  %715 = vst.msk [vmem:[#allocation2 + $0x38] sm:$0xff] %vm536, %v706
  %716 = vst.msk [vmem:[#allocation2 + $0x50] sm:$0xff] %vm536, %v708
  %v717 = vld [vmem:[%s4] sm:$0xff]
  %v718 = vld [vmem:[%s4 + $0x8] sm:$0xff]
  %v719 = vld [vmem:[%s4 + $0x10] sm:$0xff]
  %v720 = vld [vmem:[%s4 + $0x18] sm:$0xff]
  %722 = vset.pattern.permute.xlu0 8
  %723 = vperm.xlu0 %722, %v717
  %v724 = vpop.permute.xlu0 %723
  %727 = vset.pattern.permute.xlu0 8
  %728 = vperm.xlu0 %727, %v718
  %v729 = vpop.permute.xlu0 %728
  %732 = vset.pattern.permute.xlu0 8
  %733 = vperm.xlu0 %732, %v719
  %v734 = vpop.permute.xlu0 %733
  %737 = vset.pattern.permute.xlu0 8
  %738 = vperm.xlu0 %737, %v720
  %v739 = vpop.permute.xlu0 %738
  %v741 = vmul.f32 %v440, %v724
  %v742 = vmul.f32 %v439, %v729
  %v743 = vmul.f32 %v442, %v734
  %v744 = vmul.f32 %v441, %v739
  %745 = vst.msk [vmem:[#allocation2 + $0x10] sm:$0xff] %vm140, %v741
  %746 = vst.msk [vmem:[#allocation2 + $0x28] sm:$0xff] %vm140, %v742
  %747 = vst.msk [vmem:[#allocation2 + $0x40] sm:$0xff] %vm140, %v743
  %748 = vst.msk [vmem:[#allocation2 + $0x58] sm:$0xff] %vm140, %v744
  %v749 = vld [vmem:[#allocation2] sm:$0xff]
  %v750 = vld [vmem:[#allocation2 + $0x8] sm:$0xff]
  %v751 = vld [vmem:[#allocation2 + $0x10] sm:$0xff]
  %v752 = vld [vmem:[#allocation2 + $0x18] sm:$0xff]
  %v753 = vld [vmem:[#allocation2 + $0x20] sm:$0xff]
  %v754 = vld [vmem:[#allocation2 + $0x28] sm:$0xff]
  %v755 = vld [vmem:[#allocation2 + $0x30] sm:$0xff]
  %v756 = vld [vmem:[#allocation2 + $0x38] sm:$0xff]
  %v757 = vld [vmem:[#allocation2 + $0x40] sm:$0xff]
  %v758 = vld [vmem:[#allocation2 + $0x48] sm:$0xff]
  %v759 = vld [vmem:[#allocation2 + $0x50] sm:$0xff]
  %v760 = vld [vmem:[#allocation2 + $0x58] sm:$0xff]
  %v761 = vpack.c.bf16 %v752, %v749
  %v762 = vpack.c.bf16 %v753, %v750
  %v763 = vpack.c.bf16 %v754, %v751
  %v764 = vpack.c.bf16 %v758, %v755
  %v765 = vpack.c.bf16 %v759, %v756
  %v766 = vpack.c.bf16 %v760, %v757
  %v767 = vld [vmem:[%s5] sm:$0xf]
  %v768 = vld [vmem:[%s5 + $0x4] sm:$0xf]
  %v769 = vld [vmem:[%s5 + $0x8] sm:$0xf]
  %v770 = vld [vmem:[%s5 + $0xc] sm:$0xf]
  %v771 = vld [vmem:[%s5 + $0x10] sm:$0xf]
  %v772 = vld [vmem:[%s5 + $0x14] sm:$0xf]
  %v773 = vld [vmem:[%s5 + $0x18] sm:$0xf]
  %v774 = vld [vmem:[%s5 + $0x1c] sm:$0xf]
  %v775 = vld [vmem:[%s5 + $0x20] sm:$0xf]
  %v776 = vld [vmem:[%s5 + $0x24] sm:$0xf]
  %v777 = vld [vmem:[%s5 + $0x28] sm:$0xf]
  %v778 = vld [vmem:[%s5 + $0x2c] sm:$0xf]
  %v779 = vld [vmem:[%s5 + $0x30] sm:$0xf]
  %v780 = vld [vmem:[%s5 + $0x34] sm:$0xf]
  %v781 = vld [vmem:[%s5 + $0x38] sm:$0xf]
  %v782 = vld [vmem:[%s5 + $0x3c] sm:$0xf]
  %v783 = vld [vmem:[%s5 + $0x40] sm:$0xf]
  %v784 = vld [vmem:[%s5 + $0x44] sm:$0xf]
  %v785 = vld [vmem:[%s5 + $0x48] sm:$0xf]
  %v786 = vld [vmem:[%s5 + $0x4c] sm:$0xf]
  %v787 = vld [vmem:[%s5 + $0x50] sm:$0xf]
  %v788 = vld [vmem:[%s5 + $0x54] sm:$0xf]
  %v789 = vld [vmem:[%s5 + $0x58] sm:$0xf]
  %v790 = vld [vmem:[%s5 + $0x5c] sm:$0xf]
  %v791 = vld [vmem:[%s5 + $0x60] sm:$0xf]
  %v792 = vld [vmem:[%s5 + $0x64] sm:$0xf]
  %v793 = vld [vmem:[%s5 + $0x68] sm:$0xf]
  %v794 = vld [vmem:[%s5 + $0x6c] sm:$0xf]
  %v795 = vld [vmem:[%s5 + $0x70] sm:$0xf]
  %v796 = vld [vmem:[%s5 + $0x74] sm:$0xf]
  %v797 = vld [vmem:[%s5 + $0x78] sm:$0xf]
  %v798 = vld [vmem:[%s5 + $0x7c] sm:$0xf]
  %v799 = vld [vmem:[%s5 + $0x80] sm:$0xf]
  %v800 = vld [vmem:[%s5 + $0x84] sm:$0xf]
  %v801 = vld [vmem:[%s5 + $0x88] sm:$0xf]
  %v802 = vld [vmem:[%s5 + $0x8c] sm:$0xf]
  %v803 = vld [vmem:[%s6] sm:$0xff]
  %v804 = vld [vmem:[%s6 + $0x8] sm:$0xff]
  %v805 = vld [vmem:[%s6 + $0x10] sm:$0xff]
  %v806 = vld [vmem:[%s6 + $0x18] sm:$0xff]
  %v807 = vstv %s341
  %v808 = vmul.f32 %v807, %v803
  %v809 = vmul.f32 %v807, %v804
  %v810 = vmul.f32 %v807, %v805
  %v811 = vmul.f32 %v807, %v806
  %v848 = vunpack.c.l.b16 %v767
  %v849 = vunpack.c.l.b16 %v768
  %v850 = vunpack.c.l.b16 %v769
  %v851 = vunpack.c.l.b16 %v770
  %v852 = vunpack.c.l.b16 %v771
  %v853 = vunpack.c.l.b16 %v772
  %v854 = vunpack.c.l.b16 %v773
  %v855 = vunpack.c.l.b16 %v774
  %v856 = vunpack.c.l.b16 %v775
  %v857 = vunpack.c.l.b16 %v776
  %v858 = vunpack.c.l.b16 %v777
  %v859 = vunpack.c.l.b16 %v778
  %v860 = vunpack.c.l.b16 %v779
  %v861 = vunpack.c.l.b16 %v780
  %v862 = vunpack.c.l.b16 %v781
  %v863 = vunpack.c.l.b16 %v782
  %v864 = vunpack.c.l.b16 %v783
  %v865 = vunpack.c.l.b16 %v784
  %v866 = vunpack.c.l.b16 %v785
  %v867 = vunpack.c.l.b16 %v786
  %v868 = vunpack.c.l.b16 %v787
  %v869 = vunpack.c.l.b16 %v788
  %v870 = vunpack.c.l.b16 %v789
  %v871 = vunpack.c.l.b16 %v790
  %v872 = vunpack.c.l.b16 %v791
  %v873 = vunpack.c.l.b16 %v792
  %v874 = vunpack.c.l.b16 %v793
  %v875 = vunpack.c.l.b16 %v794
  %v876 = vunpack.c.l.b16 %v795
  %v877 = vunpack.c.l.b16 %v796
  %v878 = vunpack.c.l.b16 %v797
  %v879 = vunpack.c.l.b16 %v798
  %v880 = vunpack.c.l.b16 %v799
  %v881 = vunpack.c.l.b16 %v800
  %v882 = vunpack.c.l.b16 %v801
  %v883 = vunpack.c.l.b16 %v802
  %v884 = vpack.c.b16 %v849, %v848
  %v885 = vpack.c.b16 %v851, %v850
  %v886 = vpack.c.b16 %v853, %v852
  %v887 = vpack.c.b16 %v855, %v854
  %v888 = vpack.c.b16 %v857, %v856
  %v889 = vpack.c.b16 %v859, %v858
  %v890 = vpack.c.b16 %v861, %v860
  %v891 = vpack.c.b16 %v863, %v862
  %v892 = vpack.c.b16 %v865, %v864
  %v893 = vpack.c.b16 %v867, %v866
  %v894 = vpack.c.b16 %v869, %v868
  %v895 = vpack.c.b16 %v871, %v870
  %v896 = vpack.c.b16 %v873, %v872
  %v897 = vpack.c.b16 %v875, %v874
  %v898 = vpack.c.b16 %v877, %v876
  %v899 = vpack.c.b16 %v879, %v878
  %v900 = vpack.c.b16 %v881, %v880
  %v901 = vpack.c.b16 %v883, %v882
  %v921 = vsel %vm140, %v763, 0
  %v924 = vsel %vm140, %v766, 0
  %926 = vmatprep.subr.bf16.mxu0 0
  %927 = vmatpush1.bf16.msra.mxu0 %v884
  %928 = vmatprep.subr.bf16.mxu0 0
  %929 = vmatpush1.bf16.msra.mxu0 %v885
  %930 = vmatprep.subr.bf16.mxu0 0
  %931 = vmatpush1.bf16.msra.mxu0 %v886
  %932 = vmatprep.subr.bf16.mxu0 0
  %933 = vmatpush1.bf16.msra.mxu0 %v887
  %934 = vmatprep.subr.bf16.mxu0 0
  %935 = vmatpush1.bf16.msra.mxu0 %v888
  %936 = vmatprep.subr.bf16.mxu0 0
  %937 = vmatpush1.bf16.msra.mxu0 %v889
  %938 = vmatprep.subr.bf16.mxu0 0
  %939 = vmatpush1.bf16.msra.mxu0 %v890
  %940 = vmatprep.subr.bf16.mxu0 0
  %941 = vmatpush1.bf16.msra.mxu0 %v891
  %942 = vmatprep.subr.bf16.mxu0 0
  %943 = vmatpush1.bf16.msra.mxu0 %v892
  %944 = vmatprep.subr.bf16.mxu0 0
  %945 = vmatpush1.bf16.msra.mxu0 %v893
  %946 = vmatprep.subr.bf16.mxu0 0
  %947 = vmatpush1.bf16.msra.mxu0 %v894
  %948 = vmatprep.subr.bf16.mxu0 0
  %949 = vmatpush1.bf16.msra.mxu0 %v895
  %950 = vmatprep.subr.bf16.mxu0 0
  %951 = vmatpush1.bf16.msra.mxu0 %v896
  %952 = vmatprep.subr.bf16.mxu0 0
  %953 = vmatpush1.bf16.msra.mxu0 %v897
  %954 = vmatprep.subr.bf16.mxu0 0
  %955 = vmatpush1.bf16.msra.mxu0 %v898
  %956 = vmatprep.subr.bf16.mxu0 0
  %957 = vmatpush1.bf16.msra.mxu0 %v899
  %958 = vmatprep.mubr.bf16.mxu0 %v762
  %959 = vmatmul.mubr.bf16.gmra.mrb[0].mxu0 %v761
  %v960 = vpop.f32.mrb[0].mxu0
  %v961 = vadd.f32 %v808, %v960
  %v962 = vpop.f32.mrb[0].mxu0
  %v963 = vpop.f32.mrb[0].mxu0
  %v964 = vadd.f32 %v809, %v963
  %v965 = vpop.f32.mrb[0].mxu0
  %966 = vmatprep.mubr.bf16.mxu0 %v765
  %967 = vmatmul.mubr.bf16.gmra.mrb[0].mxu0 %v764
  %v968 = vpop.f32.mrb[0].mxu0
  %v969 = vadd.f32 %v810, %v968
  %v970 = vpop.f32.mrb[0].mxu0
  %v971 = vpop.f32.mrb[0].mxu0
  %v972 = vadd.f32 %v811, %v971
  %v973 = vpop.f32.mrb[0].mxu0
  %974 = vdwg.mxu0
  %975 = vmatprep.subr.bf16.mxu0 0
  %976 = vmatpush1.bf16.msra.mxu0 %v900
  %977 = vmatprep.subr.bf16.mxu0 0
  %978 = vmatpush1.bf16.msra.mxu0 %v901
  %979 = vmatprep.subr.bf16.mxu0 0
  %980 = vmatpush1.bf16.msra.mxu0 0
  %981 = vmatprep.subr.bf16.mxu0 0
  %982 = vmatpush1.bf16.msra.mxu0 0
  %983 = vmatprep.subr.bf16.mxu0 0
  %984 = vmatpush1.bf16.msra.mxu0 0
  %985 = vmatprep.subr.bf16.mxu0 0
  %986 = vmatpush1.bf16.msra.mxu0 0
  %987 = vmatprep.subr.bf16.mxu0 0
  %988 = vmatpush1.bf16.msra.mxu0 0
  %989 = vmatprep.subr.bf16.mxu0 0
  %990 = vmatpush1.bf16.msra.mxu0 0
  %991 = vmatprep.subr.bf16.mxu0 0
  %992 = vmatpush1.bf16.msra.mxu0 0
  %993 = vmatprep.subr.bf16.mxu0 0
  %994 = vmatpush1.bf16.msra.mxu0 0
  %995 = vmatprep.subr.bf16.mxu0 0
  %996 = vmatpush1.bf16.msra.mxu0 0
  %997 = vmatprep.subr.bf16.mxu0 0
  %998 = vmatpush1.bf16.msra.mxu0 0
  %999 = vmatprep.subr.bf16.mxu0 0
  %1000 = vmatpush1.bf16.msra.mxu0 0
  %1001 = vmatprep.subr.bf16.mxu0 0
  %1002 = vmatpush1.bf16.msra.mxu0 0
  %1003 = vmatprep.subr.bf16.mxu0 0
  %1004 = vmatpush1.bf16.msra.mxu0 0
  %1005 = vmatprep.subr.bf16.mxu0 0
  %1006 = vmatpush1.bf16.msra.mxu0 0
  %1007 = vmatprep.mubr.bf16.mxu0 0
  %1008 = vmatmul.mubr.bf16.gmra.mrb[0].mxu0 %v921
  %v1009 = vpop.f32.mrb[0].mxu0
  %v1010 = vadd.f32 %v961, %v1009
  %v1011 = vpop.f32.mrb[0].mxu0
  %v1012 = vpop.f32.mrb[0].mxu0
  %v1013 = vadd.f32 %v964, %v1012
  %v1014 = vpop.f32.mrb[0].mxu0
  %1015 = vmatprep.mubr.bf16.mxu0 0
  %1016 = vmatmul.mubr.bf16.gmra.mrb[0].mxu0 %v924
  %v1017 = vpop.f32.mrb[0].mxu0
  %v1018 = vadd.f32 %v969, %v1017
  %v1019 = vpop.f32.mrb[0].mxu0
  %v1020 = vpop.f32.mrb[0].mxu0
  %v1021 = vadd.f32 %v972, %v1020
  %v1022 = vpop.f32.mrb[0].mxu0
  %1023 = vdwg.mxu0
  %v1024 = vld [vmem:[%s7] sm:$0x1]
  %v1026 = vlaneseq
  %v1027 = vshrl.u32 %v1026, 7
  %v1028 = vsub.s32 0, %v1027
  %v1029 = vrot.slane %v1024, %v1028
  %v1031 = vadd.f32 %v1010, %v1029
  %v1032 = vadd.f32 %v1013, %v1029
  %v1033 = vadd.f32 %v1018, %v1029
  %v1034 = vadd.f32 %v1021, %v1029
  %vm1035 = vcmp.gt.f32.partialorder %v1031, 0.0
  %vm1036 = vcmp.gt.f32.partialorder %v1032, 0.0
  %vm1037 = vcmp.gt.f32.partialorder %v1033, 0.0
  %vm1038 = vcmp.gt.f32.partialorder %v1034, 0.0
  %v1039 = vmul.f32 %v1031, 0.2
  %v1040 = vmul.f32 %v1032, 0.2
  %v1041 = vmul.f32 %v1033, 0.2
  %v1042 = vmul.f32 %v1034, 0.2
  %v1043 = vsel %vm1035, %v1031, %v1039
  %v1044 = vsel %vm1036, %v1032, %v1040
  %v1045 = vsel %vm1037, %v1033, %v1041
  %v1046 = vsel %vm1038, %v1034, %v1042
  %vm1047 = vcmask 254976
  %1048 = vst.msk [vmem:[#allocation3] sm:$0x3] %vm1047, %v1043
  %v1051 = vunpack.c.l.s4 1983009808
  %v1052 = vunpack.c.0.s8 %v1051
  %v1053 = vlaneseq
  %v1054 = vshrl.u32 %v1053, 7
  %v1055 = vsub.s32 %v1052, %v1054
  %v1056 = vrot.slane %v1043, %v1055
  %v1057 = vcombine.high %v1056, %v1056
  %1058 = vrot.lane.b32.xlu0 %v1057, 32
  %v1059 = vpop.permute.xlu0 %1058
  %vm1061 = vcmask 517376
  %1062 = vst.msk [vmem:[#allocation3] sm:$0x3] %vm1061, %v1059
  %v1063 = vcombine.high %v1043, %v1043
  %v1065 = vunpack.c.l.s4 1983009808
  %v1066 = vunpack.c.0.s8 %v1065
  %v1067 = vlaneseq
  %v1068 = vshrl.u32 %v1067, 7
  %v1069 = vsub.s32 %v1066, %v1068
  %v1070 = vrot.slane %v1063, %v1069
  %1071 = vrot.lane.b32.xlu0 %v1070, 64
  %v1072 = vpop.permute.xlu0 %1071
  %vm1074 = vcmask 779776
  %1075 = vst.msk [vmem:[#allocation3] sm:$0x3] %vm1074, %v1072
  %v1076 = vcombine.high %v1070, %v1070
  %1077 = vrot.lane.b32.xlu0 %v1076, 96
  %v1078 = vpop.permute.xlu0 %1077
  %vm1080 = vcmask 1042176
  %1081 = vst.msk [vmem:[#allocation3] sm:$0x3] %vm1080, %v1078
  %1082 = vst.msk [vmem:[#allocation3 + $0x2] sm:$0x3] %vm1047, %v1044
  %v1085 = vunpack.c.l.s4 1983009808
  %v1086 = vunpack.c.0.s8 %v1085
  %v1087 = vlaneseq
  %v1088 = vshrl.u32 %v1087, 7
  %v1089 = vsub.s32 %v1086, %v1088
  %v1090 = vrot.slane %v1044, %v1089
  %v1091 = vcombine.high %v1090, %v1090
  %1092 = vrot.lane.b32.xlu0 %v1091, 32
  %v1093 = vpop.permute.xlu0 %1092
  %1095 = vst.msk [vmem:[#allocation3 + $0x2] sm:$0x3] %vm1061, %v1093
  %v1096 = vcombine.high %v1044, %v1044
  %v1098 = vunpack.c.l.s4 1983009808
  %v1099 = vunpack.c.0.s8 %v1098
  %v1100 = vlaneseq
  %v1101 = vshrl.u32 %v1100, 7
  %v1102 = vsub.s32 %v1099, %v1101
  %v1103 = vrot.slane %v1096, %v1102
  %1104 = vrot.lane.b32.xlu0 %v1103, 64
  %v1105 = vpop.permute.xlu0 %1104
  %1107 = vst.msk [vmem:[#allocation3 + $0x2] sm:$0x3] %vm1074, %v1105
  %v1108 = vcombine.high %v1103, %v1103
  %1109 = vrot.lane.b32.xlu0 %v1108, 96
  %v1110 = vpop.permute.xlu0 %1109
  %1112 = vst.msk [vmem:[#allocation3 + $0x2] sm:$0x3] %vm1080, %v1110
  %1113 = vst.msk [vmem:[#allocation3 + $0x4] sm:$0x3] %vm1047, %v1045
  %v1116 = vunpack.c.l.s4 1983009808
  %v1117 = vunpack.c.0.s8 %v1116
  %v1118 = vlaneseq
  %v1119 = vshrl.u32 %v1118, 7
  %v1120 = vsub.s32 %v1117, %v1119
  %v1121 = vrot.slane %v1045, %v1120
  %v1122 = vcombine.high %v1121, %v1121
  %1123 = vrot.lane.b32.xlu0 %v1122, 32
  %v1124 = vpop.permute.xlu0 %1123
  %1126 = vst.msk [vmem:[#allocation3 + $0x4] sm:$0x3] %vm1061, %v1124
  %v1127 = vcombine.high %v1045, %v1045
  %v1129 = vunpack.c.l.s4 1983009808
  %v1130 = vunpack.c.0.s8 %v1129
  %v1131 = vlaneseq
  %v1132 = vshrl.u32 %v1131, 7
  %v1133 = vsub.s32 %v1130, %v1132
  %v1134 = vrot.slane %v1127, %v1133
  %1135 = vrot.lane.b32.xlu0 %v1134, 64
  %v1136 = vpop.permute.xlu0 %1135
  %1138 = vst.msk [vmem:[#allocation3 + $0x4] sm:$0x3] %vm1074, %v1136
  %v1139 = vcombine.high %v1134, %v1134
  %1140 = vrot.lane.b32.xlu0 %v1139, 96
  %v1141 = vpop.permute.xlu0 %1140
  %1143 = vst.msk [vmem:[#allocation3 + $0x4] sm:$0x3] %vm1080, %v1141
  %1144 = vst.msk [vmem:[#allocation3 + $0x6] sm:$0x3] %vm1047, %v1046
  %v1147 = vunpack.c.l.s4 1983009808
  %v1148 = vunpack.c.0.s8 %v1147
  %v1149 = vlaneseq
  %v1150 = vshrl.u32 %v1149, 7
  %v1151 = vsub.s32 %v1148, %v1150
  %v1152 = vrot.slane %v1046, %v1151
  %v1153 = vcombine.high %v1152, %v1152
  %1154 = vrot.lane.b32.xlu0 %v1153, 32
  %v1155 = vpop.permute.xlu0 %1154
  %1157 = vst.msk [vmem:[#allocation3 + $0x6] sm:$0x3] %vm1061, %v1155
  %v1158 = vcombine.high %v1046, %v1046
  %v1160 = vunpack.c.l.s4 1983009808
  %v1161 = vunpack.c.0.s8 %v1160
  %v1162 = vlaneseq
  %v1163 = vshrl.u32 %v1162, 7
  %v1164 = vsub.s32 %v1161, %v1163
  %v1165 = vrot.slane %v1158, %v1164
  %1166 = vrot.lane.b32.xlu0 %v1165, 64
  %v1167 = vpop.permute.xlu0 %1166
  %1169 = vst.msk [vmem:[#allocation3 + $0x6] sm:$0x3] %vm1074, %v1167
  %v1170 = vcombine.high %v1165, %v1165
  %1171 = vrot.lane.b32.xlu0 %v1170, 96
  %v1172 = vpop.permute.xlu0 %1171
  %1174 = vst.msk [vmem:[#allocation3 + $0x6] sm:$0x3] %vm1080, %v1172
  %v1175 = vld [vmem:[#allocation3] sm:$0xff]
  %v1177 = vcombine.high %v1175, %v1175
  %v1179 = vunpack.c.l.s4 1983009808
  %v1180 = vunpack.c.0.s8 %v1179
  %v1181 = vlaneseq
  %v1182 = vshrl.u32 %v1181, 7
  %v1183 = vsub.s32 %v1180, %v1182
  %v1184 = vrot.slane %v1175, %v1183
  %v1186 = vunpack.c.l.s4 1983009808
  %v1187 = vunpack.c.0.s8 %v1186
  %v1188 = vlaneseq
  %v1189 = vshrl.u32 %v1188, 7
  %v1190 = vsub.s32 %v1187, %v1189
  %v1191 = vrot.slane %v1177, %v1190
  %v1192 = vcombine.high %v1184, %v1184
  %v1193 = vcombine.high %v1191, %v1191
  %v1198 = vpack.c.bf16 %v1184, %v1184
  %v1199 = vpack.c.bf16 %v1192, %v1192
  %v1200 = vpack.c.bf16 %v1191, %v1191
  %v1201 = vpack.c.bf16 %v1193, %v1193
  %v1202 = vld [vmem:[%s8] sm:$0xf]
  %v1203 = vld [vmem:[%s8 + $0x4] sm:$0xf]
  %v1204 = vld [vmem:[%s8 + $0x8] sm:$0xf]
  %v1205 = vld [vmem:[%s8 + $0xc] sm:$0xf]
  %v1206 = vld [vmem:[%s8 + $0x10] sm:$0xf]
  %v1207 = vld [vmem:[%s8 + $0x14] sm:$0xf]
  %v1208 = vld [vmem:[%s8 + $0x18] sm:$0xf]
  %v1209 = vld [vmem:[%s8 + $0x1c] sm:$0xf]
  %v1210 = vld [vmem:[%s8 + $0x20] sm:$0xf]
  %v1211 = vld [vmem:[%s8 + $0x24] sm:$0xf]
  %v1212 = vld [vmem:[%s8 + $0x28] sm:$0xf]
  %v1213 = vld [vmem:[%s8 + $0x2c] sm:$0xf]
  %v1214 = vld [vmem:[%s8 + $0x30] sm:$0xf]
  %v1215 = vld [vmem:[%s8 + $0x34] sm:$0xf]
  %v1216 = vld [vmem:[%s8 + $0x38] sm:$0xf]
  %v1217 = vld [vmem:[%s8 + $0x3c] sm:$0xf]
  %v1218 = vld [vmem:[%s8 + $0x40] sm:$0xf]
  %v1219 = vld [vmem:[%s8 + $0x44] sm:$0xf]
  %v1220 = vld [vmem:[%s8 + $0x48] sm:$0xf]
  %v1221 = vld [vmem:[%s8 + $0x4c] sm:$0xf]
  %v1222 = vld [vmem:[%s8 + $0x50] sm:$0xf]
  %v1223 = vld [vmem:[%s8 + $0x54] sm:$0xf]
  %v1224 = vld [vmem:[%s8 + $0x58] sm:$0xf]
  %v1225 = vld [vmem:[%s8 + $0x5c] sm:$0xf]
  %v1226 = vld [vmem:[%s8 + $0x60] sm:$0xf]
  %v1227 = vld [vmem:[%s8 + $0x64] sm:$0xf]
  %v1228 = vld [vmem:[%s8 + $0x68] sm:$0xf]
  %v1229 = vld [vmem:[%s8 + $0x6c] sm:$0xf]
  %v1230 = vld [vmem:[%s8 + $0x70] sm:$0xf]
  %v1231 = vld [vmem:[%s8 + $0x74] sm:$0xf]
  %v1232 = vld [vmem:[%s8 + $0x78] sm:$0xf]
  %v1233 = vld [vmem:[%s8 + $0x7c] sm:$0xf]
  %v1234 = vld [vmem:[%s8 + $0x80] sm:$0xf]
  %v1235 = vld [vmem:[%s8 + $0x84] sm:$0xf]
  %v1236 = vld [vmem:[%s8 + $0x88] sm:$0xf]
  %v1237 = vld [vmem:[%s8 + $0x8c] sm:$0xf]
  %v1238 = vld [vmem:[%s8 + $0x90] sm:$0xf]
  %v1239 = vld [vmem:[%s8 + $0x94] sm:$0xf]
  %v1240 = vld [vmem:[%s8 + $0x98] sm:$0xf]
  %v1241 = vld [vmem:[%s8 + $0x9c] sm:$0xf]
  %v1242 = vld [vmem:[%s8 + $0xa0] sm:$0xf]
  %v1243 = vld [vmem:[%s8 + $0xa4] sm:$0xf]
  %v1244 = vld [vmem:[%s8 + $0xa8] sm:$0xf]
  %v1245 = vld [vmem:[%s8 + $0xac] sm:$0xf]
  %v1246 = vld [vmem:[%s8 + $0xb0] sm:$0xf]
  %v1247 = vld [vmem:[%s8 + $0xb4] sm:$0xf]
  %v1248 = vld [vmem:[%s8 + $0xb8] sm:$0xf]
  %v1249 = vld [vmem:[%s8 + $0xbc] sm:$0xf]
  %v1250 = vld [vmem:[%s8 + $0xc0] sm:$0xf]
  %v1251 = vld [vmem:[%s8 + $0xc4] sm:$0xf]
  %v1252 = vld [vmem:[%s8 + $0xc8] sm:$0xf]
  %v1253 = vld [vmem:[%s8 + $0xcc] sm:$0xf]
  %v1254 = vld [vmem:[%s8 + $0xd0] sm:$0xf]
  %v1255 = vld [vmem:[%s8 + $0xd4] sm:$0xf]
  %v1256 = vld [vmem:[%s8 + $0xd8] sm:$0xf]
  %v1257 = vld [vmem:[%s8 + $0xdc] sm:$0xf]
  %v1258 = vld [vmem:[%s8 + $0xe0] sm:$0xf]
  %v1259 = vld [vmem:[%s8 + $0xe4] sm:$0xf]
  %v1260 = vld [vmem:[%s8 + $0xe8] sm:$0xf]
  %v1261 = vld [vmem:[%s8 + $0xec] sm:$0xf]
  %v1262 = vld [vmem:[%s8 + $0xf0] sm:$0xf]
  %v1263 = vld [vmem:[%s8 + $0xf4] sm:$0xf]
  %v1264 = vld [vmem:[%s8 + $0xf8] sm:$0xf]
  %v1265 = vld [vmem:[%s8 + $0xfc] sm:$0xf]
  %v1266 = vld [vmem:[%s9] sm:$0x1]
  %v1268 = vlaneseq
  %v1269 = vshrl.u32 %v1268, 7
  %v1270 = vsub.s32 0, %v1269
  %v1271 = vrot.slane %v1266, %v1270
  %v1337 = vunpack.c.l.b16 %v1202
  %v1338 = vunpack.c.l.b16 %v1203
  %v1339 = vunpack.c.l.b16 %v1204
  %v1340 = vunpack.c.l.b16 %v1205
  %v1341 = vunpack.c.l.b16 %v1206
  %v1342 = vunpack.c.l.b16 %v1207
  %v1343 = vunpack.c.l.b16 %v1208
  %v1344 = vunpack.c.l.b16 %v1209
  %v1345 = vunpack.c.l.b16 %v1210
  %v1346 = vunpack.c.l.b16 %v1211
  %v1347 = vunpack.c.l.b16 %v1212
  %v1348 = vunpack.c.l.b16 %v1213
  %v1349 = vunpack.c.l.b16 %v1214
  %v1350 = vunpack.c.l.b16 %v1215
  %v1351 = vunpack.c.l.b16 %v1216
  %v1352 = vunpack.c.l.b16 %v1217
  %v1353 = vunpack.c.l.b16 %v1218
  %v1354 = vunpack.c.l.b16 %v1219
  %v1355 = vunpack.c.l.b16 %v1220
  %v1356 = vunpack.c.l.b16 %v1221
  %v1357 = vunpack.c.l.b16 %v1222
  %v1358 = vunpack.c.l.b16 %v1223
  %v1359 = vunpack.c.l.b16 %v1224
  %v1360 = vunpack.c.l.b16 %v1225
  %v1361 = vunpack.c.l.b16 %v1226
  %v1362 = vunpack.c.l.b16 %v1227
  %v1363 = vunpack.c.l.b16 %v1228
  %v1364 = vunpack.c.l.b16 %v1229
  %v1365 = vunpack.c.l.b16 %v1230
  %v1366 = vunpack.c.l.b16 %v1231
  %v1367 = vunpack.c.l.b16 %v1232
  %v1368 = vunpack.c.l.b16 %v1233
  %v1369 = vunpack.c.l.b16 %v1234
  %v1370 = vunpack.c.l.b16 %v1235
  %v1371 = vunpack.c.l.b16 %v1236
  %v1372 = vunpack.c.l.b16 %v1237
  %v1373 = vunpack.c.l.b16 %v1238
  %v1374 = vunpack.c.l.b16 %v1239
  %v1375 = vunpack.c.l.b16 %v1240
  %v1376 = vunpack.c.l.b16 %v1241
  %v1377 = vunpack.c.l.b16 %v1242
  %v1378 = vunpack.c.l.b16 %v1243
  %v1379 = vunpack.c.l.b16 %v1244
  %v1380 = vunpack.c.l.b16 %v1245
  %v1381 = vunpack.c.l.b16 %v1246
  %v1382 = vunpack.c.l.b16 %v1247
  %v1383 = vunpack.c.l.b16 %v1248
  %v1384 = vunpack.c.l.b16 %v1249
  %v1385 = vunpack.c.l.b16 %v1250
  %v1386 = vunpack.c.l.b16 %v1251
  %v1387 = vunpack.c.l.b16 %v1252
  %v1388 = vunpack.c.l.b16 %v1253
  %v1389 = vunpack.c.l.b16 %v1254
  %v1390 = vunpack.c.l.b16 %v1255
  %v1391 = vunpack.c.l.b16 %v1256
  %v1392 = vunpack.c.l.b16 %v1257
  %v1393 = vunpack.c.l.b16 %v1258
  %v1394 = vunpack.c.l.b16 %v1259
  %v1395 = vunpack.c.l.b16 %v1260
  %v1396 = vunpack.c.l.b16 %v1261
  %v1397 = vunpack.c.l.b16 %v1262
  %v1398 = vunpack.c.l.b16 %v1263
  %v1399 = vunpack.c.l.b16 %v1264
  %v1400 = vunpack.c.l.b16 %v1265
  %v1401 = vpack.c.b16 %v1338, %v1337
  %v1402 = vpack.c.b16 %v1340, %v1339
  %v1403 = vpack.c.b16 %v1342, %v1341
  %v1404 = vpack.c.b16 %v1344, %v1343
  %v1405 = vpack.c.b16 %v1346, %v1345
  %v1406 = vpack.c.b16 %v1348, %v1347
  %v1407 = vpack.c.b16 %v1350, %v1349
  %v1408 = vpack.c.b16 %v1352, %v1351
  %v1409 = vpack.c.b16 %v1354, %v1353
  %v1410 = vpack.c.b16 %v1356, %v1355
  %v1411 = vpack.c.b16 %v1358, %v1357
  %v1412 = vpack.c.b16 %v1360, %v1359
  %v1413 = vpack.c.b16 %v1362, %v1361
  %v1414 = vpack.c.b16 %v1364, %v1363
  %v1415 = vpack.c.b16 %v1366, %v1365
  %v1416 = vpack.c.b16 %v1368, %v1367
  %v1417 = vpack.c.b16 %v1370, %v1369
  %v1418 = vpack.c.b16 %v1372, %v1371
  %v1419 = vpack.c.b16 %v1374, %v1373
  %v1420 = vpack.c.b16 %v1376, %v1375
  %v1421 = vpack.c.b16 %v1378, %v1377
  %v1422 = vpack.c.b16 %v1380, %v1379
  %v1423 = vpack.c.b16 %v1382, %v1381
  %v1424 = vpack.c.b16 %v1384, %v1383
  %v1425 = vpack.c.b16 %v1386, %v1385
  %v1426 = vpack.c.b16 %v1388, %v1387
  %v1427 = vpack.c.b16 %v1390, %v1389
  %v1428 = vpack.c.b16 %v1392, %v1391
  %v1429 = vpack.c.b16 %v1394, %v1393
  %v1430 = vpack.c.b16 %v1396, %v1395
  %v1431 = vpack.c.b16 %v1398, %v1397
  %v1432 = vpack.c.b16 %v1400, %v1399
  %1465 = vmatprep.subr.bf16.mxu0 0
  %1466 = vmatpush1.bf16.msra.mxu0 %v1401
  %1467 = vmatprep.subr.bf16.mxu0 0
  %1468 = vmatpush1.bf16.msra.mxu0 %v1402
  %1469 = vmatprep.subr.bf16.mxu0 0
  %1470 = vmatpush1.bf16.msra.mxu0 %v1403
  %1471 = vmatprep.subr.bf16.mxu0 0
  %1472 = vmatpush1.bf16.msra.mxu0 %v1404
  %1473 = vmatprep.subr.bf16.mxu0 0
  %1474 = vmatpush1.bf16.msra.mxu0 %v1405
  %1475 = vmatprep.subr.bf16.mxu0 0
  %1476 = vmatpush1.bf16.msra.mxu0 %v1406
  %1477 = vmatprep.subr.bf16.mxu0 0
  %1478 = vmatpush1.bf16.msra.mxu0 %v1407
  %1479 = vmatprep.subr.bf16.mxu0 0
  %1480 = vmatpush1.bf16.msra.mxu0 %v1408
  %1481 = vmatprep.subr.bf16.mxu0 0
  %1482 = vmatpush1.bf16.msra.mxu0 %v1409
  %1483 = vmatprep.subr.bf16.mxu0 0
  %1484 = vmatpush1.bf16.msra.mxu0 %v1410
  %1485 = vmatprep.subr.bf16.mxu0 0
  %1486 = vmatpush1.bf16.msra.mxu0 %v1411
  %1487 = vmatprep.subr.bf16.mxu0 0
  %1488 = vmatpush1.bf16.msra.mxu0 %v1412
  %1489 = vmatprep.subr.bf16.mxu0 0
  %1490 = vmatpush1.bf16.msra.mxu0 %v1413
  %1491 = vmatprep.subr.bf16.mxu0 0
  %1492 = vmatpush1.bf16.msra.mxu0 %v1414
  %1493 = vmatprep.subr.bf16.mxu0 0
  %1494 = vmatpush1.bf16.msra.mxu0 %v1415
  %1495 = vmatprep.subr.bf16.mxu0 0
  %1496 = vmatpush1.bf16.msra.mxu0 %v1416
  %1497 = vmatprep.mubr.bf16.mxu0 %v1199
  %1498 = vmatmul.mubr.bf16.gmra.mrb[0].mxu0 %v1198
  %v1499 = vpop.f32.mrb[0].mxu0
  %v1500 = vadd.f32 %v1271, %v1499
  %v1501 = vpop.f32.mrb[0].mxu0
  %v1502 = vpop.f32.mrb[0].mxu0
  %v1503 = vpop.f32.mrb[0].mxu0
  %1504 = vdwg.mxu0
  %1505 = vmatprep.subr.bf16.mxu0 0
  %1506 = vmatpush1.bf16.msra.mxu0 %v1417
  %1507 = vmatprep.subr.bf16.mxu0 0
  %1508 = vmatpush1.bf16.msra.mxu0 %v1418
  %1509 = vmatprep.subr.bf16.mxu0 0
  %1510 = vmatpush1.bf16.msra.mxu0 %v1419
  %1511 = vmatprep.subr.bf16.mxu0 0
  %1512 = vmatpush1.bf16.msra.mxu0 %v1420
  %1513 = vmatprep.subr.bf16.mxu0 0
  %1514 = vmatpush1.bf16.msra.mxu0 %v1421
  %1515 = vmatprep.subr.bf16.mxu0 0
  %1516 = vmatpush1.bf16.msra.mxu0 %v1422
  %1517 = vmatprep.subr.bf16.mxu0 0
  %1518 = vmatpush1.bf16.msra.mxu0 %v1423
  %1519 = vmatprep.subr.bf16.mxu0 0
  %1520 = vmatpush1.bf16.msra.mxu0 %v1424
  %1521 = vmatprep.subr.bf16.mxu0 0
  %1522 = vmatpush1.bf16.msra.mxu0 %v1425
  %1523 = vmatprep.subr.bf16.mxu0 0
  %1524 = vmatpush1.bf16.msra.mxu0 %v1426
  %1525 = vmatprep.subr.bf16.mxu0 0
  %1526 = vmatpush1.bf16.msra.mxu0 %v1427
  %1527 = vmatprep.subr.bf16.mxu0 0
  %1528 = vmatpush1.bf16.msra.mxu0 %v1428
  %1529 = vmatprep.subr.bf16.mxu0 0
  %1530 = vmatpush1.bf16.msra.mxu0 %v1429
  %1531 = vmatprep.subr.bf16.mxu0 0
  %1532 = vmatpush1.bf16.msra.mxu0 %v1430
  %1533 = vmatprep.subr.bf16.mxu0 0
  %1534 = vmatpush1.bf16.msra.mxu0 %v1431
  %1535 = vmatprep.subr.bf16.mxu0 0
  %1536 = vmatpush1.bf16.msra.mxu0 %v1432
  %1537 = vmatprep.mubr.bf16.mxu0 %v1201
  %1538 = vmatmul.mubr.bf16.gmra.mrb[0].mxu0 %v1200
  %v1539 = vpop.f32.mrb[0].mxu0
  %v1540 = vadd.f32 %v1500, %v1539
  %v1541 = vpop.f32.mrb[0].mxu0
  %v1542 = vpop.f32.mrb[0].mxu0
  %v1543 = vpop.f32.mrb[0].mxu0
  %1544 = vdwg.mxu0
  %vm1545 = vcmp.gt.f32.partialorder %v1540, 0.0
  %v1546 = vmul.f32 %v1540, 0.2
  %v1547 = vsel %vm1545, %v1540, %v1546
  %v1548 = vpack.c.bf16 %v1547, %v1547
  %v1549 = vld [vmem:[%s10] sm:$0xf]
  %v1550 = vld [vmem:[%s10 + $0x4] sm:$0xf]
  %v1551 = vld [vmem:[%s10 + $0x8] sm:$0xf]
  %v1552 = vld [vmem:[%s10 + $0xc] sm:$0xf]
  %v1553 = vld [vmem:[#allocation4] sm:$0x1]
  %v1555 = vlaneseq
  %v1556 = vshrl.u32 %v1555, 7
  %v1557 = vsub.s32 0, %v1556
  %v1558 = vrot.slane %v1553, %v1557
  %v1564 = vunpack.c.l.b16 %v1549
  %v1565 = vunpack.c.l.b16 %v1550
  %v1566 = vunpack.c.l.b16 %v1551
  %v1567 = vunpack.c.l.b16 %v1552
  %v1568 = vpack.c.b16 %v1565, %v1564
  %v1569 = vpack.c.b16 %v1567, %v1566
  %v1573 = vsel %vm140, %v1548, 0
  %1575 = vmatprep.subr.bf16.mxu0 0
  %1576 = vmatpush1.bf16.msra.mxu0 %v1568
  %1577 = vmatprep.subr.bf16.mxu0 0
  %1578 = vmatpush1.bf16.msra.mxu0 %v1569
  %1579 = vmatprep.subr.bf16.mxu0 0
  %1580 = vmatpush1.bf16.msra.mxu0 0
  %1581 = vmatprep.subr.bf16.mxu0 0
  %1582 = vmatpush1.bf16.msra.mxu0 0
  %1583 = vmatprep.subr.bf16.mxu0 0
  %1584 = vmatpush1.bf16.msra.mxu0 0
  %1585 = vmatprep.subr.bf16.mxu0 0
  %1586 = vmatpush1.bf16.msra.mxu0 0
  %1587 = vmatprep.subr.bf16.mxu0 0
  %1588 = vmatpush1.bf16.msra.mxu0 0
  %1589 = vmatprep.subr.bf16.mxu0 0
  %1590 = vmatpush1.bf16.msra.mxu0 0
  %1591 = vmatprep.subr.bf16.mxu0 0
  %1592 = vmatpush1.bf16.msra.mxu0 0
  %1593 = vmatprep.subr.bf16.mxu0 0
  %1594 = vmatpush1.bf16.msra.mxu0 0
  %1595 = vmatprep.subr.bf16.mxu0 0
  %1596 = vmatpush1.bf16.msra.mxu0 0
  %1597 = vmatprep.subr.bf16.mxu0 0
  %1598 = vmatpush1.bf16.msra.mxu0 0
  %1599 = vmatprep.subr.bf16.mxu0 0
  %1600 = vmatpush1.bf16.msra.mxu0 0
  %1601 = vmatprep.subr.bf16.mxu0 0
  %1602 = vmatpush1.bf16.msra.mxu0 0
  %1603 = vmatprep.subr.bf16.mxu0 0
  %1604 = vmatpush1.bf16.msra.mxu0 0
  %1605 = vmatprep.subr.bf16.mxu0 0
  %1606 = vmatpush1.bf16.msra.mxu0 0
  %1607 = vmatprep.mubr.bf16.mxu0 0
  %1608 = vmatmul.mubr.bf16.gmra.mrb[0].mxu0 %v1573
  %v1609 = vpop.f32.mrb[0].mxu0
  %v1610 = vadd.f32 %v1558, %v1609
  %v1611 = vpop.f32.mrb[0].mxu0
  %v1612 = vpop.f32.mrb[0].mxu0
  %v1613 = vpop.f32.mrb[0].mxu0
  %1614 = vdwg.mxu0
  %v1615 = vsub.f32 0.0, %v1610
  %v1616 = vmul.f32 %v1615, 1.442695
  %v1617 = vpow.pop %v1616
  %v1618 = vadd.f32 %v1617, 1.0
  %v1619 = vrcp.pop %v1618
  %vm1620 = vcmask 1024
  %1621 = vst.msk [vmem:[%s12] sm:$0x3] %vm1620, %v1619
  // Predicated region
  $region50: #{discriminator_forward.1} parent=0 // pred_check
    _
  $region51: #{discriminator_forward.1} parent=0 // pred_check_branch
    %1623 = sbr.rel (0) target = $region53
  $region52: #{discriminator_forward.1} parent=0 // pred_region
    _
  $region53: #{discriminator_forward.1} parent=0 // pred_fallthru
    _
  // Predicated region
  $region54: #{discriminator_forward.1} parent=0 // pred_check
    _
  $region55: #{discriminator_forward.1} parent=0 // pred_check_branch
    %1625 = sbr.rel (0) target = $region57
  $region56: #{discriminator_forward.1} parent=0 // pred_region
    _
  $region57: #{discriminator_forward.1} parent=0 // pred_fallthru
    _

</llo_original>
